<compile_context>
chip_gen: v6e
topology: v6e:2x2x1
jax: 0.10.0
libtpu: 0.0.40
codegen_flags: <defaults>
</compile_context>

<pallas_src>
import functools
import math

import jax
import jax.numpy as jnp
from jax.experimental import pallas as pl
from jax.experimental.pallas import tpu as pltpu

EPS = 1e-5                 # nn.LayerNorm default eps
_LANES = 128
_MAX_BLOCK_ROWS = 1024


# ---------------------------------------------------------------------------
# Kernel bodies
# ---------------------------------------------------------------------------

def _ln_math(x, mean_fn, gamma, beta):
    """Single-sweep LayerNorm core.

    var = E[x^2] - mean^2 (clamped at 0).  Slight cancellation risk vs. the
    two-pass form, but it removes one full-tile f32 temporary and ~2 VALU
    ops/element — relevant on v7x where the VALU slot is close to binding.
    The normalized output keeps the subtraction form (x - mean).
    """
    mean = mean_fn(x)
    ex2 = mean_fn(x * x)
    var = jnp.maximum(ex2 - mean * mean, 0.0)
    inv = jax.lax.rsqrt(var + EPS)
    return (x - mean) * inv * gamma + beta


def _row_mean(t):
    return jnp.mean(t, axis=-1, keepdims=True)


def _ln_kernel(x_ref, gamma_ref, beta_ref, o_ref):
    x = x_ref[...].astype(jnp.float32)
    y = _ln_math(x, _row_mean, gamma_ref[...], beta_ref[...])
    o_ref[...] = y.astype(o_ref.dtype)


def _masked_ln_kernel(x_ref, mask_ref, gamma_ref, beta_ref, o_ref):
    # mask_ref is (tm, 1) (row mask) or (tm, D) (full mask); both broadcast.
    x = x_ref[...].astype(jnp.float32)
    y = _ln_math(x, _row_mean, gamma_ref[...], beta_ref[...])
    y = y * mask_ref[...].astype(jnp.float32)
    o_ref[...] = y.astype(o_ref.dtype)


# --- lane-folded kernels: g = 128/D logical rows per 128-lane row ------------
# Per-row statistics become per-segment statistics; the segmented
# reduce+broadcast is a matmul with a block-diagonal ones matrix S on the MXU.

def _seg_mean_fn(s, inv_d):
    def f(t):
        return jnp.dot(t, s, preferred_element_type=jnp.float32,
                       precision=jax.lax.Precision.HIGHEST) * inv_d
    return f


def _ln_fold_kernel(x_ref, s_ref, gamma_ref, beta_ref, o_ref, *, inv_d):
    x = x_ref[...].astype(jnp.float32)
    y = _ln_math(x, _seg_mean_fn(s_ref[...], inv_d), gamma_ref[...], beta_ref[...])
    o_ref[...] = y.astype(o_ref.dtype)


def _masked_full_ln_fold_kernel(x_ref, mask_ref, s_ref, gamma_ref, beta_ref,
                                o_ref, *, inv_d):
    x = x_ref[...].astype(jnp.float32)
    y = _ln_math(x, _seg_mean_fn(s_ref[...], inv_d), gamma_ref[...], beta_ref[...])
    y = y * mask_ref[...].astype(jnp.float32)
    o_ref[...] = y.astype(o_ref.dtype)


def _masked_row_ln_fold_kernel(x_ref, mask_ref, s_ref, e_ref, gamma_ref,
                               beta_ref, o_ref, *, inv_d):
    x = x_ref[...].astype(jnp.float32)
    y = _ln_math(x, _seg_mean_fn(s_ref[...], inv_d), gamma_ref[...], beta_ref[...])
    # Broadcast the (tm, g) per-row mask to its D lanes with a tiny matmul
    # against the 0/1 expansion matrix E (g, g*D): exact in any precision.
    m = jnp.dot(mask_ref[...].astype(jnp.float32), e_ref[...],
                preferred_element_type=jnp.float32)
    o_ref[...] = (y * m).astype(o_ref.dtype)


# ---------------------------------------------------------------------------
# Sizing helpers
# ---------------------------------------------------------------------------

def _sublane_pack(dtype):
    # 8 for 4-byte, 16 for 2-byte, 32 for 1-byte element types.
    return max(8, 32 // jnp.dtype(dtype).itemsize)


def _vmem_capacity_bytes():
    try:
        return int(pltpu.get_tpu_info().vmem_capacity_bytes)
    except Exception:
        return 64 * 1024 * 1024  # conservative fallback (v7x per-core VMEM)


def _choose_block_rows(d_eff, x_dtype, mask_cols, mask_dtype, row_mult,
                       budget_bytes, fixed_bytes):
    """Largest row tile whose double-buffered footprint fits the VMEM budget."""
    x_item = jnp.dtype(x_dtype).itemsize
    per_row = 2 * 2 * d_eff * x_item          # x tile + out tile, double-buffered
    per_row += 3 * 4 * d_eff                  # ~3 live f32 temporaries / element
    if mask_cols:
        m_item = jnp.dtype(mask_dtype).itemsize
        cols_pad = ((mask_cols + _LANES - 1) // _LANES) * _LANES   # lane-padded tile
        per_row += 2 * cols_pad * m_item
    rows = max(1, (budget_bytes - fixed_bytes) // per_row)
    rows = max(row_mult, (rows // row_mult) * row_mult)
    rows = min(rows, _MAX_BLOCK_ROWS)
    return int(rows)


# ---------------------------------------------------------------------------
# Wrapper
# ---------------------------------------------------------------------------

@functools.partial(
    jax.jit, static_argnames=("block_rows", "vmem_limit_bytes", "channel_first"))
def masked_layer_norm(x, gamma, beta, mask=None, *, channel_first=False,
                      block_rows=None, vmem_limit_bytes=None):
    """Forward of MaskedLayerNorm(dim, channel_first)."""
    if channel_first:
        # PyTorch: ln(x.transpose(1,-1)).transpose(1,-1); mask broadcasts over dim 1.
        # TODO(synk): these transposes are plain-XLA HBM passes, not fused.
        x_t = jnp.moveaxis(x, 1, -1)
        mask_t = mask
        if mask is not None and mask.ndim == x.ndim:
            mask_t = jnp.moveaxis(mask, 1, -1)
        y = masked_layer_norm(x_t, gamma, beta, mask_t,
                              block_rows=block_rows,
                              vmem_limit_bytes=vmem_limit_bytes)
        return jnp.moveaxis(y, -1, 1)

    orig_shape = x.shape
    D = x.shape[-1]
    M = 1
    for s in x.shape[:-1]:
        M *= s

    # --- mask canonicalization (kept narrow; cast to f32 only in-kernel) -----
    mask_kind = None
    if mask is not None:
        if mask.ndim != x.ndim:
            # PyTorch: mask.unsqueeze(-1) -> per-row scale over the hidden dim.
            if mask.shape != x.shape[:-1]:
                mask = jnp.broadcast_to(mask, x.shape[:-1])
            mask_kind = "row"
        else:
            if mask.shape != x.shape:
                mask = jnp.broadcast_to(mask, x.shape)
            mask_kind = "full"
        if mask.dtype == jnp.bool_:
            mask = mask.astype(jnp.int8)       # 1 byte; avoids 1-bit load corners
        if mask_kind == "row":
            # Row masks are tiny (<= 4 B/row vs >= 8*D B/row of x traffic):
            # promote to f32 so the row tile keeps the f32 sublane multiple.
            mask = mask.astype(jnp.float32)

    # --- lane folding for small hidden dims ----------------------------------
    g = 1
    if D < _LANES and _LANES % D == 0 and M % (_LANES // D) == 0:
        g = _LANES // D
    d_eff = g * D
    m_rows = M // g

    x2 = x.reshape(m_rows, d_eff)              # free: slab is contiguous

    mask2 = None
    mask_cols = 0
    if mask_kind == "row":
        mask2 = mask.reshape(m_rows, g)
        mask_cols = g
    elif mask_kind == "full":
        mask2 = mask.reshape(m_rows, d_eff)
        mask_cols = d_eff

    # f32 affine params, tiled across lane segments, VMEM-resident.
    gamma2 = jnp.tile(gamma.astype(jnp.float32), g).reshape(1, d_eff)
    beta2 = jnp.tile(beta.astype(jnp.float32), g).reshape(1, d_eff)

    # --- generation-aware VMEM sizing -----------------------------------------
    vmem_cap = _vmem_capacity_bytes()
    if vmem_limit_bytes is None:
        vmem_limit_bytes = int(0.7 * vmem_cap)
    budget = int(0.3 * vmem_cap)

    row_mult = _sublane_pack(x.dtype)
    if mask2 is not None:
        mp = _sublane_pack(mask2.dtype)
        row_mult = row_mult * mp // math.gcd(row_mult, mp)

    fixed = 2 * 2 * d_eff * 4                  # gamma + beta (double-buffered)
    seg = None
    exp = None
    if g > 1:
        lane_seg = jnp.arange(d_eff, dtype=jnp.int32) // D
        # Block-diagonal ones: S[a, b] = 1 iff lanes a, b are in the same segment.
        seg = (lane_seg[:, None] == lane_seg[None, :]).astype(jnp.float32)
        fixed += 2 * d_eff * d_eff * 4
        if mask_kind == "row":
            exp = (jnp.arange(g, dtype=jnp.int32)[:, None] == lane_seg[None, :]
                   ).astype(jnp.float32)        # (g, d_eff) 0/1 expansion matrix
            fixed += 2 * g * d_eff * 4

    if block_rows is None:
        block_rows = _choose_block_rows(
            d_eff, x.dtype, mask_cols,
            mask2.dtype if mask2 is not None else None,
            row_mult, budget, fixed)
    else:
        block_rows = ((int(block_rows) + row_mult - 1) // row_mult) * row_mult
    if block_rows >= m_rows:
        block_rows = m_rows                    # full-extent block is always legal

    # cdiv grid, NO wrapper padding: Pallas masks the partial edge block.
    n_blocks = pl.cdiv(m_rows, block_rows)

    x_spec = pl.BlockSpec((block_rows, d_eff), lambda i: (i, 0))
    out_spec = pl.BlockSpec((block_rows, d_eff), lambda i: (i, 0))
    param_spec = pl.BlockSpec((1, d_eff), lambda i: (0, 0))     # resident

    compiler_params = pltpu.CompilerParams(
        dimension_semantics=("parallel",),      # v7x: shard row blocks across 2 TCs
        vmem_limit_bytes=int(vmem_limit_bytes),
    )
    out_shape = jax.ShapeDtypeStruct((m_rows, d_eff), x.dtype)

    if g == 1:
        if mask2 is None:
            kernel = _ln_kernel
            operands = (x2, gamma2, beta2)
            in_specs = [x_spec, param_spec, param_spec]
        else:
            kernel = _masked_ln_kernel
            operands = (x2, mask2, gamma2, beta2)
            in_specs = [x_spec,
                        pl.BlockSpec((block_rows, mask_cols), lambda i: (i, 0)),
                        param_spec, param_spec]
    else:
        seg_spec = pl.BlockSpec((d_eff, d_eff), lambda i: (0, 0))   # resident
        inv_d = 1.0 / D
        if mask2 is None:
            kernel = functools.partial(_ln_fold_kernel, inv_d=inv_d)
            operands = (x2, seg, gamma2, beta2)
            in_specs = [x_spec, seg_spec, param_spec, param_spec]
        elif mask_kind == "full":
            kernel = functools.partial(_masked_full_ln_fold_kernel, inv_d=inv_d)
            operands = (x2, mask2, seg, gamma2, beta2)
            in_specs = [x_spec,
                        pl.BlockSpec((block_rows, d_eff), lambda i: (i, 0)),
                        seg_spec, param_spec, param_spec]
        else:  # row mask
            kernel = functools.partial(_masked_row_ln_fold_kernel, inv_d=inv_d)
            operands = (x2, mask2, seg, exp, gamma2, beta2)
            in_specs = [x_spec,
                        pl.BlockSpec((block_rows, g), lambda i: (i, 0)),
                        seg_spec,
                        pl.BlockSpec((g, d_eff), lambda i: (0, 0)),
                        param_spec, param_spec]

    out2 = pl.pallas_call(
        kernel,
        out_shape=out_shape,
        grid_spec=pltpu.PrefetchScalarGridSpec(
            num_scalar_prefetch=0,
            grid=(n_blocks,),
            in_specs=in_specs,
            out_specs=out_spec),
        compiler_params=compiler_params,
    )(*operands)

    return out2.reshape(orig_shape)


# ---------------------------------------------------------------------------
# Reference + demo
# ---------------------------------------------------------------------------

def _reference(x, gamma, beta, mask):
    xf = x.astype(jnp.float32)
    mean = jnp.mean(xf, axis=-1, keepdims=True)
    var = jnp.mean((xf - mean) ** 2, axis=-1, keepdims=True)
    y = (xf - mean) * jax.lax.rsqrt(var + EPS) * gamma + beta
    if mask is not None:
        m = mask if mask.ndim == x.ndim else mask[..., None]
        y = y * m.astype(jnp.float32)
    return y.astype(x.dtype)


if __name__ == "__main__":
    key = jax.random.PRNGKey(0)
    kx, km, kg, kb = jax.random.split(key, 4)

    B, N, D = 2, 8, 32
    x = jax.random.normal(kx, (B, N, D), dtype=jnp.float32)
    mask_row = (jax.random.uniform(km, (B, N)) > 0.3).astype(jnp.float32)
    gamma = 1.0 + 0.1 * jax.random.normal(kg, (D,), dtype=jnp.float32)
    beta = 0.1 * jax.random.normal(kb, (D,), dtype=jnp.float32)

    tol = dict(atol=1e-4, rtol=1e-4)

    # 1) row-mask path (PyTorch `mask.unsqueeze(-1)` branch), lane-folded (g=4)
    out = jax.block_until_ready(masked_layer_norm(x, gamma, beta, mask_row))
    assert out.shape == (B, N, D)
    assert jnp.allclose(out, _reference(x, gamma, beta, mask_row), **tol)

    # 2) full-shape (B, N, D) float mask, lane-folded
    mask_full = (jax.random.uniform(km, (B, N, D)) > 0.3).astype(jnp.float32)
    out_full = jax.block_until_ready(masked_layer_norm(x, gamma, beta, mask_full))
    assert jnp.allclose(out_full, _reference(x, gamma, beta, mask_full), **tol)

    # 3) full-shape boolean mask: streamed as int8, cast to f32 only in-kernel
    mask_bool = jax.random.uniform(km, (B, N, D)) > 0.3
    out_bool = jax.block_until_ready(masked_layer_norm(x, gamma, beta, mask_bool))
    assert jnp.allclose(out_bool, _reference(x, gamma, beta, mask_bool), **tol)

    # 4) no-mask path
    out_none = jax.block_until_ready(masked_layer_norm(x, gamma, beta))
    assert jnp.allclose(out_none, _reference(x, gamma, beta, None), **tol)

    # 5) ragged row count: generic (non-folded) path + partial edge block, no padding
    x_odd = jax.random.normal(kx, (3, 5, D), dtype=jnp.float32)
    mask_odd = (jax.random.uniform(km, (3, 5)) > 0.3).astype(jnp.float32)
    out_odd = jax.block_until_ready(
        masked_layer_norm(x_odd, gamma, beta, mask_odd, block_rows=8))
    assert jnp.allclose(out_odd, _reference(x_odd, gamma, beta, mask_odd), **tol)

    # 6) channel_first=True branch (wrapper-level transposes)
    x_cf = jax.random.normal(kx, (2, D, 8), dtype=jnp.float32)
    mask_cf = (jax.random.uniform(km, (2, 8)) > 0.3).astype(jnp.float32)
    out_cf = jax.block_until_ready(
        masked_layer_norm(x_cf, gamma, beta, mask_cf, channel_first=True))
    ref_cf = jnp.moveaxis(
        _reference(jnp.moveaxis(x_cf, 1, -1), gamma, beta, mask_cf), -1, 1)
    assert jnp.allclose(out_cf, ref_cf, **tol)

    print("KERNEL_OK")
</pallas_src>

<mosaic_0001>
module attributes {stable_mosaic.version = 11 : i64} {
  func.func @_masked_row_ln_fold_kernel(%arg0: i32, %arg1: memref<4x128xf32, #tpu.memory_space<vmem>>, %arg2: memref<4x4xf32, #tpu.memory_space<vmem>>, %arg3: memref<128x128xf32, #tpu.memory_space<vmem>>, %arg4: memref<4x128xf32, #tpu.memory_space<vmem>>, %arg5: memref<1x128xf32, #tpu.memory_space<vmem>>, %arg6: memref<1x128xf32, #tpu.memory_space<vmem>>, %arg7: memref<4x128xf32, #tpu.memory_space<vmem>>) attributes {dimension_semantics = [#tpu.dimension_semantics<parallel>], iteration_bounds = array<i64: 1>, scalar_prefetch = 0 : i64, scratch_operands = 0 : i64, tpu.core_type = #tpu.core_type<tc>, window_params = [{transform_indices = @transform_0, window_bounds = array<i64: 4, 128>}, {transform_indices = @transform_1, window_bounds = array<i64: 4, 4>}, {pipeline_mode = #tpu.pipeline_mode<synchronous>, transform_indices = @transform_2, window_bounds = array<i64: 128, 128>}, {pipeline_mode = #tpu.pipeline_mode<synchronous>, transform_indices = @transform_3, window_bounds = array<i64: 4, 128>}, {pipeline_mode = #tpu.pipeline_mode<synchronous>, transform_indices = @transform_4, window_bounds = array<i64: 1, 128>}, {pipeline_mode = #tpu.pipeline_mode<synchronous>, transform_indices = @transform_5, window_bounds = array<i64: 1, 128>}, {transform_indices = @transform_6, window_bounds = array<i64: 4, 128>}]} {
    %c0 = arith.constant 0 : index
    %c0_0 = arith.constant 0 : index
    %0 = vector.load %arg1[%c0, %c0_0] : memref<4x128xf32, #tpu.memory_space<vmem>>, vector<4x128xf32>
    %c0_1 = arith.constant 0 : index
    %c0_2 = arith.constant 0 : index
    %1 = vector.load %arg3[%c0_1, %c0_2] : memref<128x128xf32, #tpu.memory_space<vmem>>, vector<128x128xf32>
    %c0_3 = arith.constant 0 : index
    %c0_4 = arith.constant 0 : index
    %2 = vector.load %arg5[%c0_3, %c0_4] : memref<1x128xf32, #tpu.memory_space<vmem>>, vector<1x128xf32>
    %c0_5 = arith.constant 0 : index
    %c0_6 = arith.constant 0 : index
    %3 = vector.load %arg6[%c0_5, %c0_6] : memref<1x128xf32, #tpu.memory_space<vmem>>, vector<1x128xf32>
    %cst = arith.constant dense<0.000000e+00> : vector<4x128xf32>
    %4 = tpu.matmul %0, %1, %cst {dimension_numbers = #tpu.dot_dimension_numbers<[1], [0], [0], [1], [0, 0, 1, 1], [], []>, precision = #tpu.contract_precision<fp32>} : vector<4x128xf32>, vector<128x128xf32>, vector<4x128xf32> -> vector<4x128xf32>
    %cst_7 = arith.constant 3.125000e-02 : f32
    %5 = vector.broadcast %cst_7 : f32 to vector<4x128xf32>
    %6 = arith.mulf %4, %5 : vector<4x128xf32>
    %7 = arith.mulf %0, %0 : vector<4x128xf32>
    %cst_8 = arith.constant dense<0.000000e+00> : vector<4x128xf32>
    %8 = tpu.matmul %7, %1, %cst_8 {dimension_numbers = #tpu.dot_dimension_numbers<[1], [0], [0], [1], [0, 0, 1, 1], [], []>, precision = #tpu.contract_precision<fp32>} : vector<4x128xf32>, vector<128x128xf32>, vector<4x128xf32> -> vector<4x128xf32>
    %cst_9 = arith.constant 3.125000e-02 : f32
    %9 = vector.broadcast %cst_9 : f32 to vector<4x128xf32>
    %10 = arith.mulf %8, %9 : vector<4x128xf32>
    %11 = arith.mulf %6, %6 : vector<4x128xf32>
    %12 = arith.subf %10, %11 : vector<4x128xf32>
    %cst_10 = arith.constant 0.000000e+00 : f32
    %13 = vector.broadcast %cst_10 : f32 to vector<4x128xf32>
    %14 = arith.maximumf %12, %13 : vector<4x128xf32>
    %cst_11 = arith.constant 9.99999974E-6 : f32
    %15 = vector.broadcast %cst_11 : f32 to vector<4x128xf32>
    %16 = arith.addf %14, %15 : vector<4x128xf32>
    %17 = math.rsqrt %16 : vector<4x128xf32>
    %18 = arith.subf %0, %6 : vector<4x128xf32>
    %19 = arith.mulf %18, %17 : vector<4x128xf32>
    %20 = vector.broadcast %2 : vector<1x128xf32> to vector<4x128xf32>
    %21 = arith.mulf %19, %20 : vector<4x128xf32>
    %22 = vector.broadcast %3 : vector<1x128xf32> to vector<4x128xf32>
    %23 = arith.addf %21, %22 : vector<4x128xf32>
    %c0_12 = arith.constant 0 : index
    %c0_13 = arith.constant 0 : index
    %24 = vector.load %arg2[%c0_12, %c0_13] : memref<4x4xf32, #tpu.memory_space<vmem>>, vector<4x4xf32>
    %c0_14 = arith.constant 0 : index
    %c0_15 = arith.constant 0 : index
    %25 = vector.load %arg4[%c0_14, %c0_15] : memref<4x128xf32, #tpu.memory_space<vmem>>, vector<4x128xf32>
    %cst_16 = arith.constant dense<0.000000e+00> : vector<4x128xf32>
    %26 = tpu.matmul %24, %25, %cst_16 {dimension_numbers = #tpu.dot_dimension_numbers<[1], [0], [0], [1], [0, 0, 1, 1], [], []>} : vector<4x4xf32>, vector<4x128xf32>, vector<4x128xf32> -> vector<4x128xf32>
    %27 = arith.mulf %23, %26 : vector<4x128xf32>
    %c0_17 = arith.constant 0 : index
    %c0_18 = arith.constant 0 : index
    %28 = vector.load %arg7[%c0_17, %c0_18] : memref<4x128xf32, #tpu.memory_space<vmem>>, vector<4x128xf32>
    tpu.vector_store %arg7[%c0_17, %c0_18], %27 {strides = array<i32>} : memref<4x128xf32, #tpu.memory_space<vmem>>, vector<4x128xf32>,
    return
  }
  func.func @transform_0(%arg0: i32) -> (i32, i32) {
    %c0_i32 = arith.constant 0 : i32
    %c0_i32_0 = arith.constant 0 : i32
    return %arg0, %c0_i32 : i32, i32
  }
  func.func @transform_1(%arg0: i32) -> (i32, i32) {
    %c0_i32 = arith.constant 0 : i32
    %c0_i32_0 = arith.constant 0 : i32
    return %arg0, %c0_i32 : i32, i32
  }
  func.func @transform_2(%arg0: i32) -> (i32, i32) {
    %c0_i32 = arith.constant 0 : i32
    %c0_i32_0 = arith.constant 0 : i32
    %c0_i32_1 = arith.constant 0 : i32
    return %c0_i32, %c0_i32_0 : i32, i32
  }
  func.func @transform_3(%arg0: i32) -> (i32, i32) {
    %c0_i32 = arith.constant 0 : i32
    %c0_i32_0 = arith.constant 0 : i32
    %c0_i32_1 = arith.constant 0 : i32
    return %c0_i32, %c0_i32_0 : i32, i32
  }
  func.func @transform_4(%arg0: i32) -> (i32, i32) {
    %c0_i32 = arith.constant 0 : i32
    %c0_i32_0 = arith.constant 0 : i32
    %c0_i32_1 = arith.constant 0 : i32
    return %c0_i32, %c0_i32_0 : i32, i32
  }
  func.func @transform_5(%arg0: i32) -> (i32, i32) {
    %c0_i32 = arith.constant 0 : i32
    %c0_i32_0 = arith.constant 0 : i32
    %c0_i32_1 = arith.constant 0 : i32
    return %c0_i32, %c0_i32_0 : i32, i32
  }
  func.func @transform_6(%arg0: i32) -> (i32, i32) {
    %c0_i32 = arith.constant 0 : i32
    %c0_i32_0 = arith.constant 0 : i32
    return %arg0, %c0_i32 : i32, i32
  }
}

</mosaic_0001>

<llo_original>
// kernel: tile.13
$region0: #{tile.13}
  #allocation0 [shape = 's32[1]{0}', space=sflag, size = 0x4, scoped, tag = 'scoped memory for tile.13']
  %s0 = inlined_call_operand.vmem [shape: f32[32], index: 0, kind: input, shape index: {}]
  %s1 = inlined_call_operand.vmem [shape: f32[4,32], index: 1, kind: output, shape index: {}]
  // Predicated region
  $region2: #{tile.13} parent=0 // pred_check
    _
  $region3: #{tile.13} parent=0 // pred_check_branch
    %3 = sbr.rel (0) target = $region5
  $region4: #{tile.13} parent=0 // pred_region
    _
  $region5: #{tile.13} parent=0 // pred_fallthru
    _
  %v4 = vld [vmem:[%s0] ss:$0 sm:$0xff]
  %5 = vst [vmem:[%s1] sm:$0xf] %v4

// kernel: tile.14
$region0: #{tile.14}
  %s0 = inlined_call_operand.vmem [shape: f32[4,32], index: 0, kind: input, shape index: {}]
  %s1 = inlined_call_operand.vmem [shape: f32[1,128], index: 1, kind: output, shape index: {}]
  $region1: #{tile.14} parent=0
    #allocation0 [shape = 'u8[4096]{0}', space=vmem, size = 0x1000, scoped, tag = 'scoped mem for output reshape']
    #allocation1 [shape = 'u8[4096]{0}', space=vmem, size = 0x1000, scoped, tag = 'scoped mem for input reshape']
    %s3 = sshll.u32 1, 4
    %s4 = ssub.s32 %s3, 1
    %v5 = vld [vmem:[%s0] sm:%s4]
    %6 = vst [vmem:[#allocation1] sm:%s4] %v5
    %v7 = vld [vmem:[#allocation1] sm:$0x1]
    %vm8 = vcmask 261120
    %9 = vst.msk [vmem:[#allocation0] sm:$0x1] %vm8, %v7
    %s10 = scalar_lea.vmem [#allocation1], 3
    %v11 = vld [vmem:[%s10] sm:$0x1]
    %12 = vrot.lane.b32.xlu0 %v11, 96
    %v13 = vpop.permute.xlu0 %12
    %vm14 = vcmask 1048320
    %15 = vst.msk [vmem:[#allocation0] sm:$0x1] %vm14, %v13
    %s16 = scalar_lea.vmem [#allocation1], 2
    %v17 = vld [vmem:[%s16] sm:$0x1]
    %18 = vrot.lane.b32.xlu0 %v17, 64
    %v19 = vpop.permute.xlu0 %18
    %vm20 = vcmask 785920
    %21 = vst.msk [vmem:[#allocation0] sm:$0x1] %vm20, %v19
    %s22 = scalar_lea.vmem [#allocation1], 1
    %v23 = vld [vmem:[%s22] sm:$0x1]
    %24 = vrot.lane.b32.xlu0 %v23, 32
    %v25 = vpop.permute.xlu0 %24
    %vm26 = vcmask 523520
    %27 = vst.msk [vmem:[#allocation0] sm:$0x1] %vm26, %v25
    %s29 = sshll.u32 1, 1
    %s30 = ssub.s32 %s29, 1
    %v32 = vld [vmem:[#allocation0] sm:%s30]
    %s33 = sshll.u32 1, 1
    %s34 = ssub.s32 %s33, 1
    %35 = vst [vmem:[%s1] sm:%s34] %v32

// kernel: masked_layer_norm.1
$region0: #{masked_layer_norm.1}
  #allocation0 [shape = 'u32[]', space=smem, size = 0x4, offset = 0x4, fixed_abs, tag = 'smem constant byte address 0x4 - core index']
  #allocation1 [shape = 'u32[144,128]{1,0:T(1,128)}', space=vmem, size = 0x12000, scoped, tag = 'internal scratch']
  %s0 = inlined_call_operand.vmem [shape: f32[4,128], index: 0, kind: input, shape index: {}]
  %s1 = inlined_call_operand.vmem [shape: f32[4,4], index: 1, kind: input, shape index: {}]
  %s2 = inlined_call_operand.vmem [shape: f32[128,128], index: 2, kind: input, shape index: {}]
  %s3 = inlined_call_operand.vmem [shape: f32[4,128], index: 3, kind: input, shape index: {}]
  %s4 = inlined_call_operand.vmem [shape: f32[1,128], index: 4, kind: input, shape index: {}]
  %s5 = inlined_call_operand.vmem [shape: f32[1,128], index: 5, kind: input, shape index: {}]
  %s6 = inlined_call_operand.vmem [shape: f32[4,128], index: 6, kind: output, shape index: {}]
  %s7 = sld [smem:[#allocation0]]
  $region34: #{masked_layer_norm.1} parent=0
    _
  %s9 = ssub.s32 1, %s7
  %s10 = scalar_select 0, %s9, %s7
  // Predicated region
  $region2: #{masked_layer_norm.1} parent=0 // pred_check
    _
  $region3: #{masked_layer_norm.1} parent=0 // pred_check_branch
    %12 = sbr.rel (0) target = $region5
  $region4: #{masked_layer_norm.1} parent=0 // pred_region
    _
  $region5: #{masked_layer_norm.1} parent=0 // pred_fallthru
    _
  // Predicated region
  $region6: #{masked_layer_norm.1} parent=0 // pred_check
    _
  $region7: #{masked_layer_norm.1} parent=0 // pred_check_branch
    %14 = sbr.rel (0) target = $region9
  $region8: #{masked_layer_norm.1} parent=0 // pred_region
    _
  $region9: #{masked_layer_norm.1} parent=0 // pred_fallthru
    _
  // Predicated region
  $region10: #{masked_layer_norm.1} parent=0 // pred_check
    _
  $region11: #{masked_layer_norm.1} parent=0 // pred_check_branch
    %16 = sbr.rel (0) target = $region13
  $region12: #{masked_layer_norm.1} parent=0 // pred_region
    _
  $region13: #{masked_layer_norm.1} parent=0 // pred_fallthru
    _
  // Predicated region
  $region14: #{masked_layer_norm.1} parent=0 // pred_check
    _
  $region15: #{masked_layer_norm.1} parent=0 // pred_check_branch
    %18 = sbr.rel (0) target = $region17
  $region16: #{masked_layer_norm.1} parent=0 // pred_region
    _
  $region17: #{masked_layer_norm.1} parent=0 // pred_fallthru
    _
  // Predicated region
  $region18: #{masked_layer_norm.1} parent=0 // pred_check
    _
  $region19: #{masked_layer_norm.1} parent=0 // pred_check_branch
    %20 = sbr.rel (0) target = $region21
  $region20: #{masked_layer_norm.1} parent=0 // pred_region
    _
  $region21: #{masked_layer_norm.1} parent=0 // pred_fallthru
    _
  // Predicated region
  $region22: #{masked_layer_norm.1} parent=0 // pred_check
    _
  $region23: #{masked_layer_norm.1} parent=0 // pred_check_branch
    %22 = sbr.rel (0) target = $region25
  $region24: #{masked_layer_norm.1} parent=0 // pred_region
    _
  $region25: #{masked_layer_norm.1} parent=0 // pred_fallthru
    _
  %v23 = vld [vmem:[%s0] sm:$0xf]
  %v24 = vld [vmem:[%s2] sm:$0xff]
  %v25 = vld [vmem:[%s2 + $0x8] sm:$0xff]
  %v26 = vld [vmem:[%s2 + $0x10] sm:$0xff]
  %v27 = vld [vmem:[%s2 + $0x18] sm:$0xff]
  %v28 = vld [vmem:[%s2 + $0x20] sm:$0xff]
  %v29 = vld [vmem:[%s2 + $0x28] sm:$0xff]
  %v30 = vld [vmem:[%s2 + $0x30] sm:$0xff]
  %v31 = vld [vmem:[%s2 + $0x38] sm:$0xff]
  %v32 = vld [vmem:[%s2 + $0x40] sm:$0xff]
  %v33 = vld [vmem:[%s2 + $0x48] sm:$0xff]
  %v34 = vld [vmem:[%s2 + $0x50] sm:$0xff]
  %v35 = vld [vmem:[%s2 + $0x58] sm:$0xff]
  %v36 = vld [vmem:[%s2 + $0x60] sm:$0xff]
  %v37 = vld [vmem:[%s2 + $0x68] sm:$0xff]
  %v38 = vld [vmem:[%s2 + $0x70] sm:$0xff]
  %v39 = vld [vmem:[%s2 + $0x78] sm:$0xff]
  %v40 = vld [vmem:[%s4] sm:$0x1]
  %v41 = vld [vmem:[%s5] sm:$0x1]
  %42 = vmatprep.subr.mxu0 0.0
  %v43 = vand.u32 %v39, 4294901760
  %44 = vmatpush1.msra.mxu0 %v43
  %45 = vmatprep.subr.mxu0 0.0
  %v46 = vand.u32 %v38, 4294901760
  %47 = vmatpush1.msra.mxu0 %v46
  %48 = vmatprep.subr.mxu0 0.0
  %v49 = vand.u32 %v37, 4294901760
  %50 = vmatpush1.msra.mxu0 %v49
  %51 = vmatprep.subr.mxu0 0.0
  %v52 = vand.u32 %v36, 4294901760
  %53 = vmatpush1.msra.mxu0 %v52
  %54 = vmatprep.subr.mxu0 0.0
  %v55 = vand.u32 %v35, 4294901760
  %56 = vmatpush1.msra.mxu0 %v55
  %57 = vmatprep.subr.mxu0 0.0
  %v58 = vand.u32 %v34, 4294901760
  %59 = vmatpush1.msra.mxu0 %v58
  %60 = vmatprep.subr.mxu0 0.0
  %v61 = vand.u32 %v33, 4294901760
  %62 = vmatpush1.msra.mxu0 %v61
  %63 = vmatprep.subr.mxu0 0.0
  %v64 = vand.u32 %v32, 4294901760
  %65 = vmatpush1.msra.mxu0 %v64
  %66 = vmatprep.subr.mxu0 0.0
  %v67 = vand.u32 %v31, 4294901760
  %68 = vmatpush1.msra.mxu0 %v67
  %69 = vmatprep.subr.mxu0 0.0
  %v70 = vand.u32 %v30, 4294901760
  %71 = vmatpush1.msra.mxu0 %v70
  %72 = vmatprep.subr.mxu0 0.0
  %v73 = vand.u32 %v29, 4294901760
  %74 = vmatpush1.msra.mxu0 %v73
  %75 = vmatprep.subr.mxu0 0.0
  %v76 = vand.u32 %v28, 4294901760
  %77 = vmatpush1.msra.mxu0 %v76
  %78 = vmatprep.subr.mxu0 0.0
  %v79 = vand.u32 %v27, 4294901760
  %80 = vmatpush1.msra.mxu0 %v79
  %81 = vmatprep.subr.mxu0 0.0
  %v82 = vand.u32 %v26, 4294901760
  %83 = vmatpush1.msra.mxu0 %v82
  %84 = vmatprep.subr.mxu0 0.0
  %v85 = vand.u32 %v25, 4294901760
  %86 = vmatpush1.msra.mxu0 %v85
  %87 = vmatprep.subr.mxu0 0.0
  %v88 = vand.u32 %v24, 4294901760
  %89 = vmatpush1.msra.mxu0 %v88
  %90 = vmatprep.subr.mxu0 0.0
  %91 = vmatpush2.msra.mxu0 0.0
  %92 = vmatprep.subr.mxu0 0.0
  %93 = vmatpush2.msra.mxu0 0.0
  %94 = vmatprep.subr.mxu0 0.0
  %95 = vmatpush2.msra.mxu0 0.0
  %96 = vmatprep.subr.mxu0 0.0
  %97 = vmatpush2.msra.mxu0 0.0
  %98 = vmatprep.subr.mxu0 0.0
  %99 = vmatpush2.msra.mxu0 0.0
  %100 = vmatprep.subr.mxu0 0.0
  %101 = vmatpush2.msra.mxu0 0.0
  %102 = vmatprep.subr.mxu0 0.0
  %103 = vmatpush2.msra.mxu0 0.0
  %104 = vmatprep.subr.mxu0 0.0
  %105 = vmatpush2.msra.mxu0 0.0
  %106 = vmatprep.subr.mxu0 0.0
  %107 = vmatpush2.msra.mxu0 0.0
  %108 = vmatprep.subr.mxu0 0.0
  %109 = vmatpush2.msra.mxu0 0.0
  %110 = vmatprep.subr.mxu0 0.0
  %111 = vmatpush2.msra.mxu0 0.0
  %112 = vmatprep.subr.mxu0 0.0
  %113 = vmatpush2.msra.mxu0 0.0
  %114 = vmatprep.subr.mxu0 0.0
  %115 = vmatpush2.msra.mxu0 0.0
  %116 = vmatprep.subr.mxu0 0.0
  %117 = vmatpush2.msra.mxu0 0.0
  %118 = vmatprep.subr.mxu0 0.0
  %119 = vmatpush2.msra.mxu0 0.0
  %120 = vmatprep.subr.mxu0 0.0
  %121 = vmatpush2.msra.mxu0 0.0
  %122 = vmatprep.mubr.f32.mxu0 0.0
  %v123 = vand.u32 %v23, 4294901760
  %v124 = vsub.f32 %v23, %v123
  %v125 = vand.u32 %v124, 4294901760
  %v126 = vsub.f32 %v124, %v125
  %v127 = vand.u32 %v126, 4294901760
  %128 = vmatmul.mubr.f32.gmra.mxu0 %v127
  %v129 = vpop.f32.mrf.mxu0
  %v130 = vadd.f32 0.0, %v129
  %v131 = vpop.f32.mrf.mxu0
  %132 = vdwg.mxu0
  %133 = vmatprep.subr.mxu0 0.0
  %v134 = vand.u32 %v39, 4294901760
  %v135 = vsub.f32 %v39, %v134
  %v136 = vand.u32 %v135, 4294901760
  %v137 = vsub.f32 %v135, %v136
  %v138 = vand.u32 %v137, 4294901760
  %139 = vmatpush1.msra.mxu0 %v138
  %140 = vmatprep.subr.mxu0 0.0
  %v141 = vand.u32 %v38, 4294901760
  %v142 = vsub.f32 %v38, %v141
  %v143 = vand.u32 %v142, 4294901760
  %v144 = vsub.f32 %v142, %v143
  %v145 = vand.u32 %v144, 4294901760
  %146 = vmatpush1.msra.mxu0 %v145
  %147 = vmatprep.subr.mxu0 0.0
  %v148 = vand.u32 %v37, 4294901760
  %v149 = vsub.f32 %v37, %v148
  %v150 = vand.u32 %v149, 4294901760
  %v151 = vsub.f32 %v149, %v150
  %v152 = vand.u32 %v151, 4294901760
  %153 = vmatpush1.msra.mxu0 %v152
  %154 = vmatprep.subr.mxu0 0.0
  %v155 = vand.u32 %v36, 4294901760
  %v156 = vsub.f32 %v36, %v155
  %v157 = vand.u32 %v156, 4294901760
  %v158 = vsub.f32 %v156, %v157
  %v159 = vand.u32 %v158, 4294901760
  %160 = vmatpush1.msra.mxu0 %v159
  %161 = vmatprep.subr.mxu0 0.0
  %v162 = vand.u32 %v35, 4294901760
  %v163 = vsub.f32 %v35, %v162
  %v164 = vand.u32 %v163, 4294901760
  %v165 = vsub.f32 %v163, %v164
  %v166 = vand.u32 %v165, 4294901760
  %167 = vmatpush1.msra.mxu0 %v166
  %168 = vmatprep.subr.mxu0 0.0
  %v169 = vand.u32 %v34, 4294901760
  %v170 = vsub.f32 %v34, %v169
  %v171 = vand.u32 %v170, 4294901760
  %v172 = vsub.f32 %v170, %v171
  %v173 = vand.u32 %v172, 4294901760
  %174 = vmatpush1.msra.mxu0 %v173
  %175 = vmatprep.subr.mxu0 0.0
  %v176 = vand.u32 %v33, 4294901760
  %v177 = vsub.f32 %v33, %v176
  %v178 = vand.u32 %v177, 4294901760
  %v179 = vsub.f32 %v177, %v178
  %v180 = vand.u32 %v179, 4294901760
  %181 = vmatpush1.msra.mxu0 %v180
  %182 = vmatprep.subr.mxu0 0.0
  %v183 = vand.u32 %v32, 4294901760
  %v184 = vsub.f32 %v32, %v183
  %v185 = vand.u32 %v184, 4294901760
  %v186 = vsub.f32 %v184, %v185
  %v187 = vand.u32 %v186, 4294901760
  %188 = vmatpush1.msra.mxu0 %v187
  %189 = vmatprep.subr.mxu0 0.0
  %v190 = vand.u32 %v31, 4294901760
  %v191 = vsub.f32 %v31, %v190
  %v192 = vand.u32 %v191, 4294901760
  %v193 = vsub.f32 %v191, %v192
  %v194 = vand.u32 %v193, 4294901760
  %195 = vmatpush1.msra.mxu0 %v194
  %196 = vmatprep.subr.mxu0 0.0
  %v197 = vand.u32 %v30, 4294901760
  %v198 = vsub.f32 %v30, %v197
  %v199 = vand.u32 %v198, 4294901760
  %v200 = vsub.f32 %v198, %v199
  %v201 = vand.u32 %v200, 4294901760
  %202 = vmatpush1.msra.mxu0 %v201
  %203 = vmatprep.subr.mxu0 0.0
  %v204 = vand.u32 %v29, 4294901760
  %v205 = vsub.f32 %v29, %v204
  %v206 = vand.u32 %v205, 4294901760
  %v207 = vsub.f32 %v205, %v206
  %v208 = vand.u32 %v207, 4294901760
  %209 = vmatpush1.msra.mxu0 %v208
  %210 = vmatprep.subr.mxu0 0.0
  %v211 = vand.u32 %v28, 4294901760
  %v212 = vsub.f32 %v28, %v211
  %v213 = vand.u32 %v212, 4294901760
  %v214 = vsub.f32 %v212, %v213
  %v215 = vand.u32 %v214, 4294901760
  %216 = vmatpush1.msra.mxu0 %v215
  %217 = vmatprep.subr.mxu0 0.0
  %v218 = vand.u32 %v27, 4294901760
  %v219 = vsub.f32 %v27, %v218
  %v220 = vand.u32 %v219, 4294901760
  %v221 = vsub.f32 %v219, %v220
  %v222 = vand.u32 %v221, 4294901760
  %223 = vmatpush1.msra.mxu0 %v222
  %224 = vmatprep.subr.mxu0 0.0
  %v225 = vand.u32 %v26, 4294901760
  %v226 = vsub.f32 %v26, %v225
  %v227 = vand.u32 %v226, 4294901760
  %v228 = vsub.f32 %v226, %v227
  %v229 = vand.u32 %v228, 4294901760
  %230 = vmatpush1.msra.mxu0 %v229
  %231 = vmatprep.subr.mxu0 0.0
  %v232 = vand.u32 %v25, 4294901760
  %v233 = vsub.f32 %v25, %v232
  %v234 = vand.u32 %v233, 4294901760
  %v235 = vsub.f32 %v233, %v234
  %v236 = vand.u32 %v235, 4294901760
  %237 = vmatpush1.msra.mxu0 %v236
  %238 = vmatprep.subr.mxu0 0.0
  %v239 = vand.u32 %v24, 4294901760
  %v240 = vsub.f32 %v24, %v239
  %v241 = vand.u32 %v240, 4294901760
  %v242 = vsub.f32 %v240, %v241
  %v243 = vand.u32 %v242, 4294901760
  %244 = vmatpush1.msra.mxu0 %v243
  %245 = vmatprep.subr.mxu0 0.0
  %246 = vmatpush2.msra.mxu0 0.0
  %247 = vmatprep.subr.mxu0 0.0
  %248 = vmatpush2.msra.mxu0 0.0
  %249 = vmatprep.subr.mxu0 0.0
  %250 = vmatpush2.msra.mxu0 0.0
  %251 = vmatprep.subr.mxu0 0.0
  %252 = vmatpush2.msra.mxu0 0.0
  %253 = vmatprep.subr.mxu0 0.0
  %254 = vmatpush2.msra.mxu0 0.0
  %255 = vmatprep.subr.mxu0 0.0
  %256 = vmatpush2.msra.mxu0 0.0
  %257 = vmatprep.subr.mxu0 0.0
  %258 = vmatpush2.msra.mxu0 0.0
  %259 = vmatprep.subr.mxu0 0.0
  %260 = vmatpush2.msra.mxu0 0.0
  %261 = vmatprep.subr.mxu0 0.0
  %262 = vmatpush2.msra.mxu0 0.0
  %263 = vmatprep.subr.mxu0 0.0
  %264 = vmatpush2.msra.mxu0 0.0
  %265 = vmatprep.subr.mxu0 0.0
  %266 = vmatpush2.msra.mxu0 0.0
  %267 = vmatprep.subr.mxu0 0.0
  %268 = vmatpush2.msra.mxu0 0.0
  %269 = vmatprep.subr.mxu0 0.0
  %270 = vmatpush2.msra.mxu0 0.0
  %271 = vmatprep.subr.mxu0 0.0
  %272 = vmatpush2.msra.mxu0 0.0
  %273 = vmatprep.subr.mxu0 0.0
  %274 = vmatpush2.msra.mxu0 0.0
  %275 = vmatprep.subr.mxu0 0.0
  %276 = vmatpush2.msra.mxu0 0.0
  %277 = vmatprep.mubr.f32.mxu0 0.0
  %v278 = vand.u32 %v23, 4294901760
  %279 = vmatmul.mubr.f32.gmra.mxu0 %v278
  %v280 = vpop.f32.mrf.mxu0
  %v281 = vadd.f32 %v130, %v280
  %v282 = vpop.f32.mrf.mxu0
  %283 = vdwg.mxu0
  %284 = vmatprep.subr.mxu0 0.0
  %v285 = vand.u32 %v39, 4294901760
  %v286 = vsub.f32 %v39, %v285
  %287 = vmatpush1.msra.mxu0 %v286
  %288 = vmatprep.subr.mxu0 0.0
  %v289 = vand.u32 %v38, 4294901760
  %v290 = vsub.f32 %v38, %v289
  %291 = vmatpush1.msra.mxu0 %v290
  %292 = vmatprep.subr.mxu0 0.0
  %v293 = vand.u32 %v37, 4294901760
  %v294 = vsub.f32 %v37, %v293
  %295 = vmatpush1.msra.mxu0 %v294
  %296 = vmatprep.subr.mxu0 0.0
  %v297 = vand.u32 %v36, 4294901760
  %v298 = vsub.f32 %v36, %v297
  %299 = vmatpush1.msra.mxu0 %v298
  %300 = vmatprep.subr.mxu0 0.0
  %v301 = vand.u32 %v35, 4294901760
  %v302 = vsub.f32 %v35, %v301
  %303 = vmatpush1.msra.mxu0 %v302
  %304 = vmatprep.subr.mxu0 0.0
  %v305 = vand.u32 %v34, 4294901760
  %v306 = vsub.f32 %v34, %v305
  %307 = vmatpush1.msra.mxu0 %v306
  %308 = vmatprep.subr.mxu0 0.0
  %v309 = vand.u32 %v33, 4294901760
  %v310 = vsub.f32 %v33, %v309
  %311 = vmatpush1.msra.mxu0 %v310
  %312 = vmatprep.subr.mxu0 0.0
  %v313 = vand.u32 %v32, 4294901760
  %v314 = vsub.f32 %v32, %v313
  %315 = vmatpush1.msra.mxu0 %v314
  %316 = vmatprep.subr.mxu0 0.0
  %v317 = vand.u32 %v31, 4294901760
  %v318 = vsub.f32 %v31, %v317
  %319 = vmatpush1.msra.mxu0 %v318
  %320 = vmatprep.subr.mxu0 0.0
  %v321 = vand.u32 %v30, 4294901760
  %v322 = vsub.f32 %v30, %v321
  %323 = vmatpush1.msra.mxu0 %v322
  %324 = vmatprep.subr.mxu0 0.0
  %v325 = vand.u32 %v29, 4294901760
  %v326 = vsub.f32 %v29, %v325
  %327 = vmatpush1.msra.mxu0 %v326
  %328 = vmatprep.subr.mxu0 0.0
  %v329 = vand.u32 %v28, 4294901760
  %v330 = vsub.f32 %v28, %v329
  %331 = vmatpush1.msra.mxu0 %v330
  %332 = vmatprep.subr.mxu0 0.0
  %v333 = vand.u32 %v27, 4294901760
  %v334 = vsub.f32 %v27, %v333
  %335 = vmatpush1.msra.mxu0 %v334
  %336 = vmatprep.subr.mxu0 0.0
  %v337 = vand.u32 %v26, 4294901760
  %v338 = vsub.f32 %v26, %v337
  %339 = vmatpush1.msra.mxu0 %v338
  %340 = vmatprep.subr.mxu0 0.0
  %v341 = vand.u32 %v25, 4294901760
  %v342 = vsub.f32 %v25, %v341
  %343 = vmatpush1.msra.mxu0 %v342
  %344 = vmatprep.subr.mxu0 0.0
  %v345 = vand.u32 %v24, 4294901760
  %v346 = vsub.f32 %v24, %v345
  %347 = vmatpush1.msra.mxu0 %v346
  %348 = vmatprep.subr.mxu0 0.0
  %349 = vmatpush2.msra.mxu0 0.0
  %350 = vmatprep.subr.mxu0 0.0
  %351 = vmatpush2.msra.mxu0 0.0
  %352 = vmatprep.subr.mxu0 0.0
  %353 = vmatpush2.msra.mxu0 0.0
  %354 = vmatprep.subr.mxu0 0.0
  %355 = vmatpush2.msra.mxu0 0.0
  %356 = vmatprep.subr.mxu0 0.0
  %357 = vmatpush2.msra.mxu0 0.0
  %358 = vmatprep.subr.mxu0 0.0
  %359 = vmatpush2.msra.mxu0 0.0
  %360 = vmatprep.subr.mxu0 0.0
  %361 = vmatpush2.msra.mxu0 0.0
  %362 = vmatprep.subr.mxu0 0.0
  %363 = vmatpush2.msra.mxu0 0.0
  %364 = vmatprep.subr.mxu0 0.0
  %365 = vmatpush2.msra.mxu0 0.0
  %366 = vmatprep.subr.mxu0 0.0
  %367 = vmatpush2.msra.mxu0 0.0
  %368 = vmatprep.subr.mxu0 0.0
  %369 = vmatpush2.msra.mxu0 0.0
  %370 = vmatprep.subr.mxu0 0.0
  %371 = vmatpush2.msra.mxu0 0.0
  %372 = vmatprep.subr.mxu0 0.0
  %373 = vmatpush2.msra.mxu0 0.0
  %374 = vmatprep.subr.mxu0 0.0
  %375 = vmatpush2.msra.mxu0 0.0
  %376 = vmatprep.subr.mxu0 0.0
  %377 = vmatpush2.msra.mxu0 0.0
  %378 = vmatprep.subr.mxu0 0.0
  %379 = vmatpush2.msra.mxu0 0.0
  %380 = vmatprep.mubr.f32.mxu0 0.0
  %v381 = vand.u32 %v23, 4294901760
  %v382 = vsub.f32 %v23, %v381
  %383 = vmatmul.mubr.f32.gmra.mxu0 %v382
  %v384 = vpop.f32.mrf.mxu0
  %v385 = vadd.f32 %v281, %v384
  %v386 = vpop.f32.mrf.mxu0
  %387 = vdwg.mxu0
  %388 = vmatprep.subr.mxu0 0.0
  %v389 = vand.u32 %v39, 4294901760
  %390 = vmatpush1.msra.mxu0 %v389
  %391 = vmatprep.subr.mxu0 0.0
  %v392 = vand.u32 %v38, 4294901760
  %393 = vmatpush1.msra.mxu0 %v392
  %394 = vmatprep.subr.mxu0 0.0
  %v395 = vand.u32 %v37, 4294901760
  %396 = vmatpush1.msra.mxu0 %v395
  %397 = vmatprep.subr.mxu0 0.0
  %v398 = vand.u32 %v36, 4294901760
  %399 = vmatpush1.msra.mxu0 %v398
  %400 = vmatprep.subr.mxu0 0.0
  %v401 = vand.u32 %v35, 4294901760
  %402 = vmatpush1.msra.mxu0 %v401
  %403 = vmatprep.subr.mxu0 0.0
  %v404 = vand.u32 %v34, 4294901760
  %405 = vmatpush1.msra.mxu0 %v404
  %406 = vmatprep.subr.mxu0 0.0
  %v407 = vand.u32 %v33, 4294901760
  %408 = vmatpush1.msra.mxu0 %v407
  %409 = vmatprep.subr.mxu0 0.0
  %v410 = vand.u32 %v32, 4294901760
  %411 = vmatpush1.msra.mxu0 %v410
  %412 = vmatprep.subr.mxu0 0.0
  %v413 = vand.u32 %v31, 4294901760
  %414 = vmatpush1.msra.mxu0 %v413
  %415 = vmatprep.subr.mxu0 0.0
  %v416 = vand.u32 %v30, 4294901760
  %417 = vmatpush1.msra.mxu0 %v416
  %418 = vmatprep.subr.mxu0 0.0
  %v419 = vand.u32 %v29, 4294901760
  %420 = vmatpush1.msra.mxu0 %v419
  %421 = vmatprep.subr.mxu0 0.0
  %v422 = vand.u32 %v28, 4294901760
  %423 = vmatpush1.msra.mxu0 %v422
  %424 = vmatprep.subr.mxu0 0.0
  %v425 = vand.u32 %v27, 4294901760
  %426 = vmatpush1.msra.mxu0 %v425
  %427 = vmatprep.subr.mxu0 0.0
  %v428 = vand.u32 %v26, 4294901760
  %429 = vmatpush1.msra.mxu0 %v428
  %430 = vmatprep.subr.mxu0 0.0
  %v431 = vand.u32 %v25, 4294901760
  %432 = vmatpush1.msra.mxu0 %v431
  %433 = vmatprep.subr.mxu0 0.0
  %v434 = vand.u32 %v24, 4294901760
  %435 = vmatpush1.msra.mxu0 %v434
  %436 = vmatprep.subr.mxu0 0.0
  %437 = vmatpush2.msra.mxu0 0.0
  %438 = vmatprep.subr.mxu0 0.0
  %439 = vmatpush2.msra.mxu0 0.0
  %440 = vmatprep.subr.mxu0 0.0
  %441 = vmatpush2.msra.mxu0 0.0
  %442 = vmatprep.subr.mxu0 0.0
  %443 = vmatpush2.msra.mxu0 0.0
  %444 = vmatprep.subr.mxu0 0.0
  %445 = vmatpush2.msra.mxu0 0.0
  %446 = vmatprep.subr.mxu0 0.0
  %447 = vmatpush2.msra.mxu0 0.0
  %448 = vmatprep.subr.mxu0 0.0
  %449 = vmatpush2.msra.mxu0 0.0
  %450 = vmatprep.subr.mxu0 0.0
  %451 = vmatpush2.msra.mxu0 0.0
  %452 = vmatprep.subr.mxu0 0.0
  %453 = vmatpush2.msra.mxu0 0.0
  %454 = vmatprep.subr.mxu0 0.0
  %455 = vmatpush2.msra.mxu0 0.0
  %456 = vmatprep.subr.mxu0 0.0
  %457 = vmatpush2.msra.mxu0 0.0
  %458 = vmatprep.subr.mxu0 0.0
  %459 = vmatpush2.msra.mxu0 0.0
  %460 = vmatprep.subr.mxu0 0.0
  %461 = vmatpush2.msra.mxu0 0.0
  %462 = vmatprep.subr.mxu0 0.0
  %463 = vmatpush2.msra.mxu0 0.0
  %464 = vmatprep.subr.mxu0 0.0
  %465 = vmatpush2.msra.mxu0 0.0
  %466 = vmatprep.subr.mxu0 0.0
  %467 = vmatpush2.msra.mxu0 0.0
  %468 = vmatprep.mubr.f32.mxu0 0.0
  %v469 = vand.u32 %v23, 4294901760
  %v470 = vsub.f32 %v23, %v469
  %v471 = vand.u32 %v470, 4294901760
  %472 = vmatmul.mubr.f32.gmra.mxu0 %v471
  %v473 = vpop.f32.mrf.mxu0
  %v474 = vadd.f32 %v385, %v473
  %v475 = vpop.f32.mrf.mxu0
  %476 = vdwg.mxu0
  %477 = vmatprep.subr.mxu0 0.0
  %v478 = vand.u32 %v39, 4294901760
  %v479 = vsub.f32 %v39, %v478
  %v480 = vand.u32 %v479, 4294901760
  %481 = vmatpush1.msra.mxu0 %v480
  %482 = vmatprep.subr.mxu0 0.0
  %v483 = vand.u32 %v38, 4294901760
  %v484 = vsub.f32 %v38, %v483
  %v485 = vand.u32 %v484, 4294901760
  %486 = vmatpush1.msra.mxu0 %v485
  %487 = vmatprep.subr.mxu0 0.0
  %v488 = vand.u32 %v37, 4294901760
  %v489 = vsub.f32 %v37, %v488
  %v490 = vand.u32 %v489, 4294901760
  %491 = vmatpush1.msra.mxu0 %v490
  %492 = vmatprep.subr.mxu0 0.0
  %v493 = vand.u32 %v36, 4294901760
  %v494 = vsub.f32 %v36, %v493
  %v495 = vand.u32 %v494, 4294901760
  %496 = vmatpush1.msra.mxu0 %v495
  %497 = vmatprep.subr.mxu0 0.0
  %v498 = vand.u32 %v35, 4294901760
  %v499 = vsub.f32 %v35, %v498
  %v500 = vand.u32 %v499, 4294901760
  %501 = vmatpush1.msra.mxu0 %v500
  %502 = vmatprep.subr.mxu0 0.0
  %v503 = vand.u32 %v34, 4294901760
  %v504 = vsub.f32 %v34, %v503
  %v505 = vand.u32 %v504, 4294901760
  %506 = vmatpush1.msra.mxu0 %v505
  %507 = vmatprep.subr.mxu0 0.0
  %v508 = vand.u32 %v33, 4294901760
  %v509 = vsub.f32 %v33, %v508
  %v510 = vand.u32 %v509, 4294901760
  %511 = vmatpush1.msra.mxu0 %v510
  %512 = vmatprep.subr.mxu0 0.0
  %v513 = vand.u32 %v32, 4294901760
  %v514 = vsub.f32 %v32, %v513
  %v515 = vand.u32 %v514, 4294901760
  %516 = vmatpush1.msra.mxu0 %v515
  %517 = vmatprep.subr.mxu0 0.0
  %v518 = vand.u32 %v31, 4294901760
  %v519 = vsub.f32 %v31, %v518
  %v520 = vand.u32 %v519, 4294901760
  %521 = vmatpush1.msra.mxu0 %v520
  %522 = vmatprep.subr.mxu0 0.0
  %v523 = vand.u32 %v30, 4294901760
  %v524 = vsub.f32 %v30, %v523
  %v525 = vand.u32 %v524, 4294901760
  %526 = vmatpush1.msra.mxu0 %v525
  %527 = vmatprep.subr.mxu0 0.0
  %v528 = vand.u32 %v29, 4294901760
  %v529 = vsub.f32 %v29, %v528
  %v530 = vand.u32 %v529, 4294901760
  %531 = vmatpush1.msra.mxu0 %v530
  %532 = vmatprep.subr.mxu0 0.0
  %v533 = vand.u32 %v28, 4294901760
  %v534 = vsub.f32 %v28, %v533
  %v535 = vand.u32 %v534, 4294901760
  %536 = vmatpush1.msra.mxu0 %v535
  %537 = vmatprep.subr.mxu0 0.0
  %v538 = vand.u32 %v27, 4294901760
  %v539 = vsub.f32 %v27, %v538
  %v540 = vand.u32 %v539, 4294901760
  %541 = vmatpush1.msra.mxu0 %v540
  %542 = vmatprep.subr.mxu0 0.0
  %v543 = vand.u32 %v26, 4294901760
  %v544 = vsub.f32 %v26, %v543
  %v545 = vand.u32 %v544, 4294901760
  %546 = vmatpush1.msra.mxu0 %v545
  %547 = vmatprep.subr.mxu0 0.0
  %v548 = vand.u32 %v25, 4294901760
  %v549 = vsub.f32 %v25, %v548
  %v550 = vand.u32 %v549, 4294901760
  %551 = vmatpush1.msra.mxu0 %v550
  %552 = vmatprep.subr.mxu0 0.0
  %v553 = vand.u32 %v24, 4294901760
  %v554 = vsub.f32 %v24, %v553
  %v555 = vand.u32 %v554, 4294901760
  %556 = vmatpush1.msra.mxu0 %v555
  %557 = vmatprep.subr.mxu0 0.0
  %558 = vmatpush2.msra.mxu0 0.0
  %559 = vmatprep.subr.mxu0 0.0
  %560 = vmatpush2.msra.mxu0 0.0
  %561 = vmatprep.subr.mxu0 0.0
  %562 = vmatpush2.msra.mxu0 0.0
  %563 = vmatprep.subr.mxu0 0.0
  %564 = vmatpush2.msra.mxu0 0.0
  %565 = vmatprep.subr.mxu0 0.0
  %566 = vmatpush2.msra.mxu0 0.0
  %567 = vmatprep.subr.mxu0 0.0
  %568 = vmatpush2.msra.mxu0 0.0
  %569 = vmatprep.subr.mxu0 0.0
  %570 = vmatpush2.msra.mxu0 0.0
  %571 = vmatprep.subr.mxu0 0.0
  %572 = vmatpush2.msra.mxu0 0.0
  %573 = vmatprep.subr.mxu0 0.0
  %574 = vmatpush2.msra.mxu0 0.0
  %575 = vmatprep.subr.mxu0 0.0
  %576 = vmatpush2.msra.mxu0 0.0
  %577 = vmatprep.subr.mxu0 0.0
  %578 = vmatpush2.msra.mxu0 0.0
  %579 = vmatprep.subr.mxu0 0.0
  %580 = vmatpush2.msra.mxu0 0.0
  %581 = vmatprep.subr.mxu0 0.0
  %582 = vmatpush2.msra.mxu0 0.0
  %583 = vmatprep.subr.mxu0 0.0
  %584 = vmatpush2.msra.mxu0 0.0
  %585 = vmatprep.subr.mxu0 0.0
  %586 = vmatpush2.msra.mxu0 0.0
  %587 = vmatprep.subr.mxu0 0.0
  %588 = vmatpush2.msra.mxu0 0.0
  %589 = vmatprep.mubr.f32.mxu0 0.0
  %v590 = vand.u32 %v23, 4294901760
  %591 = vmatmul.mubr.f32.gmra.mxu0 %v590
  %v592 = vpop.f32.mrf.mxu0
  %v593 = vadd.f32 %v474, %v592
  %v594 = vpop.f32.mrf.mxu0
  %595 = vdwg.mxu0
  %596 = vmatprep.subr.mxu0 0.0
  %v597 = vand.u32 %v39, 4294901760
  %598 = vmatpush1.msra.mxu0 %v597
  %599 = vmatprep.subr.mxu0 0.0
  %v600 = vand.u32 %v38, 4294901760
  %601 = vmatpush1.msra.mxu0 %v600
  %602 = vmatprep.subr.mxu0 0.0
  %v603 = vand.u32 %v37, 4294901760
  %604 = vmatpush1.msra.mxu0 %v603
  %605 = vmatprep.subr.mxu0 0.0
  %v606 = vand.u32 %v36, 4294901760
  %607 = vmatpush1.msra.mxu0 %v606
  %608 = vmatprep.subr.mxu0 0.0
  %v609 = vand.u32 %v35, 4294901760
  %610 = vmatpush1.msra.mxu0 %v609
  %611 = vmatprep.subr.mxu0 0.0
  %v612 = vand.u32 %v34, 4294901760
  %613 = vmatpush1.msra.mxu0 %v612
  %614 = vmatprep.subr.mxu0 0.0
  %v615 = vand.u32 %v33, 4294901760
  %616 = vmatpush1.msra.mxu0 %v615
  %617 = vmatprep.subr.mxu0 0.0
  %v618 = vand.u32 %v32, 4294901760
  %619 = vmatpush1.msra.mxu0 %v618
  %620 = vmatprep.subr.mxu0 0.0
  %v621 = vand.u32 %v31, 4294901760
  %622 = vmatpush1.msra.mxu0 %v621
  %623 = vmatprep.subr.mxu0 0.0
  %v624 = vand.u32 %v30, 4294901760
  %625 = vmatpush1.msra.mxu0 %v624
  %626 = vmatprep.subr.mxu0 0.0
  %v627 = vand.u32 %v29, 4294901760
  %628 = vmatpush1.msra.mxu0 %v627
  %629 = vmatprep.subr.mxu0 0.0
  %v630 = vand.u32 %v28, 4294901760
  %631 = vmatpush1.msra.mxu0 %v630
  %632 = vmatprep.subr.mxu0 0.0
  %v633 = vand.u32 %v27, 4294901760
  %634 = vmatpush1.msra.mxu0 %v633
  %635 = vmatprep.subr.mxu0 0.0
  %v636 = vand.u32 %v26, 4294901760
  %637 = vmatpush1.msra.mxu0 %v636
  %638 = vmatprep.subr.mxu0 0.0
  %v639 = vand.u32 %v25, 4294901760
  %640 = vmatpush1.msra.mxu0 %v639
  %641 = vmatprep.subr.mxu0 0.0
  %v642 = vand.u32 %v24, 4294901760
  %643 = vmatpush1.msra.mxu0 %v642
  %644 = vmatprep.subr.mxu0 0.0
  %645 = vmatpush2.msra.mxu0 0.0
  %646 = vmatprep.subr.mxu0 0.0
  %647 = vmatpush2.msra.mxu0 0.0
  %648 = vmatprep.subr.mxu0 0.0
  %649 = vmatpush2.msra.mxu0 0.0
  %650 = vmatprep.subr.mxu0 0.0
  %651 = vmatpush2.msra.mxu0 0.0
  %652 = vmatprep.subr.mxu0 0.0
  %653 = vmatpush2.msra.mxu0 0.0
  %654 = vmatprep.subr.mxu0 0.0
  %655 = vmatpush2.msra.mxu0 0.0
  %656 = vmatprep.subr.mxu0 0.0
  %657 = vmatpush2.msra.mxu0 0.0
  %658 = vmatprep.subr.mxu0 0.0
  %659 = vmatpush2.msra.mxu0 0.0
  %660 = vmatprep.subr.mxu0 0.0
  %661 = vmatpush2.msra.mxu0 0.0
  %662 = vmatprep.subr.mxu0 0.0
  %663 = vmatpush2.msra.mxu0 0.0
  %664 = vmatprep.subr.mxu0 0.0
  %665 = vmatpush2.msra.mxu0 0.0
  %666 = vmatprep.subr.mxu0 0.0
  %667 = vmatpush2.msra.mxu0 0.0
  %668 = vmatprep.subr.mxu0 0.0
  %669 = vmatpush2.msra.mxu0 0.0
  %670 = vmatprep.subr.mxu0 0.0
  %671 = vmatpush2.msra.mxu0 0.0
  %672 = vmatprep.subr.mxu0 0.0
  %673 = vmatpush2.msra.mxu0 0.0
  %674 = vmatprep.subr.mxu0 0.0
  %675 = vmatpush2.msra.mxu0 0.0
  %676 = vmatprep.mubr.f32.mxu0 0.0
  %v677 = vand.u32 %v23, 4294901760
  %678 = vmatmul.mubr.f32.gmra.mxu0 %v677
  %v679 = vpop.f32.mrf.mxu0
  %v680 = vadd.f32 %v593, %v679
  %v681 = vpop.f32.mrf.mxu0
  %682 = vdwg.mxu0
  %v683 = vmul.f32 %v680, 0.03125
  %v684 = vmul.f32 %v23, %v23
  %685 = vmatprep.subr.mxu0 0.0
  %v686 = vand.u32 %v39, 4294901760
  %687 = vmatpush1.msra.mxu0 %v686
  %688 = vmatprep.subr.mxu0 0.0
  %v689 = vand.u32 %v38, 4294901760
  %690 = vmatpush1.msra.mxu0 %v689
  %691 = vmatprep.subr.mxu0 0.0
  %v692 = vand.u32 %v37, 4294901760
  %693 = vmatpush1.msra.mxu0 %v692
  %694 = vmatprep.subr.mxu0 0.0
  %v695 = vand.u32 %v36, 4294901760
  %696 = vmatpush1.msra.mxu0 %v695
  %697 = vmatprep.subr.mxu0 0.0
  %v698 = vand.u32 %v35, 4294901760
  %699 = vmatpush1.msra.mxu0 %v698
  %700 = vmatprep.subr.mxu0 0.0
  %v701 = vand.u32 %v34, 4294901760
  %702 = vmatpush1.msra.mxu0 %v701
  %703 = vmatprep.subr.mxu0 0.0
  %v704 = vand.u32 %v33, 4294901760
  %705 = vmatpush1.msra.mxu0 %v704
  %706 = vmatprep.subr.mxu0 0.0
  %v707 = vand.u32 %v32, 4294901760
  %708 = vmatpush1.msra.mxu0 %v707
  %709 = vmatprep.subr.mxu0 0.0
  %v710 = vand.u32 %v31, 4294901760
  %711 = vmatpush1.msra.mxu0 %v710
  %712 = vmatprep.subr.mxu0 0.0
  %v713 = vand.u32 %v30, 4294901760
  %714 = vmatpush1.msra.mxu0 %v713
  %715 = vmatprep.subr.mxu0 0.0
  %v716 = vand.u32 %v29, 4294901760
  %717 = vmatpush1.msra.mxu0 %v716
  %718 = vmatprep.subr.mxu0 0.0
  %v719 = vand.u32 %v28, 4294901760
  %720 = vmatpush1.msra.mxu0 %v719
  %721 = vmatprep.subr.mxu0 0.0
  %v722 = vand.u32 %v27, 4294901760
  %723 = vmatpush1.msra.mxu0 %v722
  %724 = vmatprep.subr.mxu0 0.0
  %v725 = vand.u32 %v26, 4294901760
  %726 = vmatpush1.msra.mxu0 %v725
  %727 = vmatprep.subr.mxu0 0.0
  %v728 = vand.u32 %v25, 4294901760
  %729 = vmatpush1.msra.mxu0 %v728
  %730 = vmatprep.subr.mxu0 0.0
  %v731 = vand.u32 %v24, 4294901760
  %732 = vmatpush1.msra.mxu0 %v731
  %733 = vmatprep.subr.mxu0 0.0
  %734 = vmatpush2.msra.mxu0 0.0
  %735 = vmatprep.subr.mxu0 0.0
  %736 = vmatpush2.msra.mxu0 0.0
  %737 = vmatprep.subr.mxu0 0.0
  %738 = vmatpush2.msra.mxu0 0.0
  %739 = vmatprep.subr.mxu0 0.0
  %740 = vmatpush2.msra.mxu0 0.0
  %741 = vmatprep.subr.mxu0 0.0
  %742 = vmatpush2.msra.mxu0 0.0
  %743 = vmatprep.subr.mxu0 0.0
  %744 = vmatpush2.msra.mxu0 0.0
  %745 = vmatprep.subr.mxu0 0.0
  %746 = vmatpush2.msra.mxu0 0.0
  %747 = vmatprep.subr.mxu0 0.0
  %748 = vmatpush2.msra.mxu0 0.0
  %749 = vmatprep.subr.mxu0 0.0
  %750 = vmatpush2.msra.mxu0 0.0
  %751 = vmatprep.subr.mxu0 0.0
  %752 = vmatpush2.msra.mxu0 0.0
  %753 = vmatprep.subr.mxu0 0.0
  %754 = vmatpush2.msra.mxu0 0.0
  %755 = vmatprep.subr.mxu0 0.0
  %756 = vmatpush2.msra.mxu0 0.0
  %757 = vmatprep.subr.mxu0 0.0
  %758 = vmatpush2.msra.mxu0 0.0
  %759 = vmatprep.subr.mxu0 0.0
  %760 = vmatpush2.msra.mxu0 0.0
  %761 = vmatprep.subr.mxu0 0.0
  %762 = vmatpush2.msra.mxu0 0.0
  %763 = vmatprep.subr.mxu0 0.0
  %764 = vmatpush2.msra.mxu0 0.0
  %765 = vmatprep.mubr.f32.mxu0 0.0
  %v766 = vand.u32 %v684, 4294901760
  %v767 = vsub.f32 %v684, %v766
  %v768 = vand.u32 %v767, 4294901760
  %v769 = vsub.f32 %v767, %v768
  %v770 = vand.u32 %v769, 4294901760
  %771 = vmatmul.mubr.f32.gmra.mxu0 %v770
  %v772 = vpop.f32.mrf.mxu0
  %v773 = vadd.f32 0.0, %v772
  %v774 = vpop.f32.mrf.mxu0
  %775 = vdwg.mxu0
  %776 = vmatprep.subr.mxu0 0.0
  %v777 = vand.u32 %v39, 4294901760
  %v778 = vsub.f32 %v39, %v777
  %v779 = vand.u32 %v778, 4294901760
  %v780 = vsub.f32 %v778, %v779
  %v781 = vand.u32 %v780, 4294901760
  %782 = vmatpush1.msra.mxu0 %v781
  %783 = vmatprep.subr.mxu0 0.0
  %v784 = vand.u32 %v38, 4294901760
  %v785 = vsub.f32 %v38, %v784
  %v786 = vand.u32 %v785, 4294901760
  %v787 = vsub.f32 %v785, %v786
  %v788 = vand.u32 %v787, 4294901760
  %789 = vmatpush1.msra.mxu0 %v788
  %790 = vmatprep.subr.mxu0 0.0
  %v791 = vand.u32 %v37, 4294901760
  %v792 = vsub.f32 %v37, %v791
  %v793 = vand.u32 %v792, 4294901760
  %v794 = vsub.f32 %v792, %v793
  %v795 = vand.u32 %v794, 4294901760
  %796 = vmatpush1.msra.mxu0 %v795
  %797 = vmatprep.subr.mxu0 0.0
  %v798 = vand.u32 %v36, 4294901760
  %v799 = vsub.f32 %v36, %v798
  %v800 = vand.u32 %v799, 4294901760
  %v801 = vsub.f32 %v799, %v800
  %v802 = vand.u32 %v801, 4294901760
  %803 = vmatpush1.msra.mxu0 %v802
  %804 = vmatprep.subr.mxu0 0.0
  %v805 = vand.u32 %v35, 4294901760
  %v806 = vsub.f32 %v35, %v805
  %v807 = vand.u32 %v806, 4294901760
  %v808 = vsub.f32 %v806, %v807
  %v809 = vand.u32 %v808, 4294901760
  %810 = vmatpush1.msra.mxu0 %v809
  %811 = vmatprep.subr.mxu0 0.0
  %v812 = vand.u32 %v34, 4294901760
  %v813 = vsub.f32 %v34, %v812
  %v814 = vand.u32 %v813, 4294901760
  %v815 = vsub.f32 %v813, %v814
  %v816 = vand.u32 %v815, 4294901760
  %817 = vmatpush1.msra.mxu0 %v816
  %818 = vmatprep.subr.mxu0 0.0
  %v819 = vand.u32 %v33, 4294901760
  %v820 = vsub.f32 %v33, %v819
  %v821 = vand.u32 %v820, 4294901760
  %v822 = vsub.f32 %v820, %v821
  %v823 = vand.u32 %v822, 4294901760
  %824 = vmatpush1.msra.mxu0 %v823
  %825 = vmatprep.subr.mxu0 0.0
  %v826 = vand.u32 %v32, 4294901760
  %v827 = vsub.f32 %v32, %v826
  %v828 = vand.u32 %v827, 4294901760
  %v829 = vsub.f32 %v827, %v828
  %v830 = vand.u32 %v829, 4294901760
  %831 = vmatpush1.msra.mxu0 %v830
  %832 = vmatprep.subr.mxu0 0.0
  %v833 = vand.u32 %v31, 4294901760
  %v834 = vsub.f32 %v31, %v833
  %v835 = vand.u32 %v834, 4294901760
  %v836 = vsub.f32 %v834, %v835
  %v837 = vand.u32 %v836, 4294901760
  %838 = vmatpush1.msra.mxu0 %v837
  %839 = vmatprep.subr.mxu0 0.0
  %v840 = vand.u32 %v30, 4294901760
  %v841 = vsub.f32 %v30, %v840
  %v842 = vand.u32 %v841, 4294901760
  %v843 = vsub.f32 %v841, %v842
  %v844 = vand.u32 %v843, 4294901760
  %845 = vmatpush1.msra.mxu0 %v844
  %846 = vmatprep.subr.mxu0 0.0
  %v847 = vand.u32 %v29, 4294901760
  %v848 = vsub.f32 %v29, %v847
  %v849 = vand.u32 %v848, 4294901760
  %v850 = vsub.f32 %v848, %v849
  %v851 = vand.u32 %v850, 4294901760
  %852 = vmatpush1.msra.mxu0 %v851
  %853 = vmatprep.subr.mxu0 0.0
  %v854 = vand.u32 %v28, 4294901760
  %v855 = vsub.f32 %v28, %v854
  %v856 = vand.u32 %v855, 4294901760
  %v857 = vsub.f32 %v855, %v856
  %v858 = vand.u32 %v857, 4294901760
  %859 = vmatpush1.msra.mxu0 %v858
  %860 = vmatprep.subr.mxu0 0.0
  %v861 = vand.u32 %v27, 4294901760
  %v862 = vsub.f32 %v27, %v861
  %v863 = vand.u32 %v862, 4294901760
  %v864 = vsub.f32 %v862, %v863
  %v865 = vand.u32 %v864, 4294901760
  %866 = vmatpush1.msra.mxu0 %v865
  %867 = vmatprep.subr.mxu0 0.0
  %v868 = vand.u32 %v26, 4294901760
  %v869 = vsub.f32 %v26, %v868
  %v870 = vand.u32 %v869, 4294901760
  %v871 = vsub.f32 %v869, %v870
  %v872 = vand.u32 %v871, 4294901760
  %873 = vmatpush1.msra.mxu0 %v872
  %874 = vmatprep.subr.mxu0 0.0
  %v875 = vand.u32 %v25, 4294901760
  %v876 = vsub.f32 %v25, %v875
  %v877 = vand.u32 %v876, 4294901760
  %v878 = vsub.f32 %v876, %v877
  %v879 = vand.u32 %v878, 4294901760
  %880 = vmatpush1.msra.mxu0 %v879
  %881 = vmatprep.subr.mxu0 0.0
  %v882 = vand.u32 %v24, 4294901760
  %v883 = vsub.f32 %v24, %v882
  %v884 = vand.u32 %v883, 4294901760
  %v885 = vsub.f32 %v883, %v884
  %v886 = vand.u32 %v885, 4294901760
  %887 = vmatpush1.msra.mxu0 %v886
  %888 = vmatprep.subr.mxu0 0.0
  %889 = vmatpush2.msra.mxu0 0.0
  %890 = vmatprep.subr.mxu0 0.0
  %891 = vmatpush2.msra.mxu0 0.0
  %892 = vmatprep.subr.mxu0 0.0
  %893 = vmatpush2.msra.mxu0 0.0
  %894 = vmatprep.subr.mxu0 0.0
  %895 = vmatpush2.msra.mxu0 0.0
  %896 = vmatprep.subr.mxu0 0.0
  %897 = vmatpush2.msra.mxu0 0.0
  %898 = vmatprep.subr.mxu0 0.0
  %899 = vmatpush2.msra.mxu0 0.0
  %900 = vmatprep.subr.mxu0 0.0
  %901 = vmatpush2.msra.mxu0 0.0
  %902 = vmatprep.subr.mxu0 0.0
  %903 = vmatpush2.msra.mxu0 0.0
  %904 = vmatprep.subr.mxu0 0.0
  %905 = vmatpush2.msra.mxu0 0.0
  %906 = vmatprep.subr.mxu0 0.0
  %907 = vmatpush2.msra.mxu0 0.0
  %908 = vmatprep.subr.mxu0 0.0
  %909 = vmatpush2.msra.mxu0 0.0
  %910 = vmatprep.subr.mxu0 0.0
  %911 = vmatpush2.msra.mxu0 0.0
  %912 = vmatprep.subr.mxu0 0.0
  %913 = vmatpush2.msra.mxu0 0.0
  %914 = vmatprep.subr.mxu0 0.0
  %915 = vmatpush2.msra.mxu0 0.0
  %916 = vmatprep.subr.mxu0 0.0
  %917 = vmatpush2.msra.mxu0 0.0
  %918 = vmatprep.subr.mxu0 0.0
  %919 = vmatpush2.msra.mxu0 0.0
  %920 = vmatprep.mubr.f32.mxu0 0.0
  %v921 = vand.u32 %v684, 4294901760
  %922 = vmatmul.mubr.f32.gmra.mxu0 %v921
  %v923 = vpop.f32.mrf.mxu0
  %v924 = vadd.f32 %v773, %v923
  %v925 = vpop.f32.mrf.mxu0
  %926 = vdwg.mxu0
  %927 = vmatprep.subr.mxu0 0.0
  %v928 = vand.u32 %v39, 4294901760
  %v929 = vsub.f32 %v39, %v928
  %930 = vmatpush1.msra.mxu0 %v929
  %931 = vmatprep.subr.mxu0 0.0
  %v932 = vand.u32 %v38, 4294901760
  %v933 = vsub.f32 %v38, %v932
  %934 = vmatpush1.msra.mxu0 %v933
  %935 = vmatprep.subr.mxu0 0.0
  %v936 = vand.u32 %v37, 4294901760
  %v937 = vsub.f32 %v37, %v936
  %938 = vmatpush1.msra.mxu0 %v937
  %939 = vmatprep.subr.mxu0 0.0
  %v940 = vand.u32 %v36, 4294901760
  %v941 = vsub.f32 %v36, %v940
  %942 = vmatpush1.msra.mxu0 %v941
  %943 = vmatprep.subr.mxu0 0.0
  %v944 = vand.u32 %v35, 4294901760
  %v945 = vsub.f32 %v35, %v944
  %946 = vmatpush1.msra.mxu0 %v945
  %947 = vmatprep.subr.mxu0 0.0
  %v948 = vand.u32 %v34, 4294901760
  %v949 = vsub.f32 %v34, %v948
  %950 = vmatpush1.msra.mxu0 %v949
  %951 = vmatprep.subr.mxu0 0.0
  %v952 = vand.u32 %v33, 4294901760
  %v953 = vsub.f32 %v33, %v952
  %954 = vmatpush1.msra.mxu0 %v953
  %955 = vmatprep.subr.mxu0 0.0
  %v956 = vand.u32 %v32, 4294901760
  %v957 = vsub.f32 %v32, %v956
  %958 = vmatpush1.msra.mxu0 %v957
  %959 = vmatprep.subr.mxu0 0.0
  %v960 = vand.u32 %v31, 4294901760
  %v961 = vsub.f32 %v31, %v960
  %962 = vmatpush1.msra.mxu0 %v961
  %963 = vmatprep.subr.mxu0 0.0
  %v964 = vand.u32 %v30, 4294901760
  %v965 = vsub.f32 %v30, %v964
  %966 = vmatpush1.msra.mxu0 %v965
  %967 = vmatprep.subr.mxu0 0.0
  %v968 = vand.u32 %v29, 4294901760
  %v969 = vsub.f32 %v29, %v968
  %970 = vmatpush1.msra.mxu0 %v969
  %971 = vmatprep.subr.mxu0 0.0
  %v972 = vand.u32 %v28, 4294901760
  %v973 = vsub.f32 %v28, %v972
  %974 = vmatpush1.msra.mxu0 %v973
  %975 = vmatprep.subr.mxu0 0.0
  %v976 = vand.u32 %v27, 4294901760
  %v977 = vsub.f32 %v27, %v976
  %978 = vmatpush1.msra.mxu0 %v977
  %979 = vmatprep.subr.mxu0 0.0
  %v980 = vand.u32 %v26, 4294901760
  %v981 = vsub.f32 %v26, %v980
  %982 = vmatpush1.msra.mxu0 %v981
  %983 = vmatprep.subr.mxu0 0.0
  %v984 = vand.u32 %v25, 4294901760
  %v985 = vsub.f32 %v25, %v984
  %986 = vmatpush1.msra.mxu0 %v985
  %987 = vmatprep.subr.mxu0 0.0
  %v988 = vand.u32 %v24, 4294901760
  %v989 = vsub.f32 %v24, %v988
  %990 = vmatpush1.msra.mxu0 %v989
  %991 = vmatprep.subr.mxu0 0.0
  %992 = vmatpush2.msra.mxu0 0.0
  %993 = vmatprep.subr.mxu0 0.0
  %994 = vmatpush2.msra.mxu0 0.0
  %995 = vmatprep.subr.mxu0 0.0
  %996 = vmatpush2.msra.mxu0 0.0
  %997 = vmatprep.subr.mxu0 0.0
  %998 = vmatpush2.msra.mxu0 0.0
  %999 = vmatprep.subr.mxu0 0.0
  %1000 = vmatpush2.msra.mxu0 0.0
  %1001 = vmatprep.subr.mxu0 0.0
  %1002 = vmatpush2.msra.mxu0 0.0
  %1003 = vmatprep.subr.mxu0 0.0
  %1004 = vmatpush2.msra.mxu0 0.0
  %1005 = vmatprep.subr.mxu0 0.0
  %1006 = vmatpush2.msra.mxu0 0.0
  %1007 = vmatprep.subr.mxu0 0.0
  %1008 = vmatpush2.msra.mxu0 0.0
  %1009 = vmatprep.subr.mxu0 0.0
  %1010 = vmatpush2.msra.mxu0 0.0
  %1011 = vmatprep.subr.mxu0 0.0
  %1012 = vmatpush2.msra.mxu0 0.0
  %1013 = vmatprep.subr.mxu0 0.0
  %1014 = vmatpush2.msra.mxu0 0.0
  %1015 = vmatprep.subr.mxu0 0.0
  %1016 = vmatpush2.msra.mxu0 0.0
  %1017 = vmatprep.subr.mxu0 0.0
  %1018 = vmatpush2.msra.mxu0 0.0
  %1019 = vmatprep.subr.mxu0 0.0
  %1020 = vmatpush2.msra.mxu0 0.0
  %1021 = vmatprep.subr.mxu0 0.0
  %1022 = vmatpush2.msra.mxu0 0.0
  %1023 = vmatprep.mubr.f32.mxu0 0.0
  %v1024 = vand.u32 %v684, 4294901760
  %v1025 = vsub.f32 %v684, %v1024
  %1026 = vmatmul.mubr.f32.gmra.mxu0 %v1025
  %v1027 = vpop.f32.mrf.mxu0
  %v1028 = vadd.f32 %v924, %v1027
  %v1029 = vpop.f32.mrf.mxu0
  %1030 = vdwg.mxu0
  %1031 = vmatprep.subr.mxu0 0.0
  %v1032 = vand.u32 %v39, 4294901760
  %1033 = vmatpush1.msra.mxu0 %v1032
  %1034 = vmatprep.subr.mxu0 0.0
  %v1035 = vand.u32 %v38, 4294901760
  %1036 = vmatpush1.msra.mxu0 %v1035
  %1037 = vmatprep.subr.mxu0 0.0
  %v1038 = vand.u32 %v37, 4294901760
  %1039 = vmatpush1.msra.mxu0 %v1038
  %1040 = vmatprep.subr.mxu0 0.0
  %v1041 = vand.u32 %v36, 4294901760
  %1042 = vmatpush1.msra.mxu0 %v1041
  %1043 = vmatprep.subr.mxu0 0.0
  %v1044 = vand.u32 %v35, 4294901760
  %1045 = vmatpush1.msra.mxu0 %v1044
  %1046 = vmatprep.subr.mxu0 0.0
  %v1047 = vand.u32 %v34, 4294901760
  %1048 = vmatpush1.msra.mxu0 %v1047
  %1049 = vmatprep.subr.mxu0 0.0
  %v1050 = vand.u32 %v33, 4294901760
  %1051 = vmatpush1.msra.mxu0 %v1050
  %1052 = vmatprep.subr.mxu0 0.0
  %v1053 = vand.u32 %v32, 4294901760
  %1054 = vmatpush1.msra.mxu0 %v1053
  %1055 = vmatprep.subr.mxu0 0.0
  %v1056 = vand.u32 %v31, 4294901760
  %1057 = vmatpush1.msra.mxu0 %v1056
  %1058 = vmatprep.subr.mxu0 0.0
  %v1059 = vand.u32 %v30, 4294901760
  %1060 = vmatpush1.msra.mxu0 %v1059
  %1061 = vmatprep.subr.mxu0 0.0
  %v1062 = vand.u32 %v29, 4294901760
  %1063 = vmatpush1.msra.mxu0 %v1062
  %1064 = vmatprep.subr.mxu0 0.0
  %v1065 = vand.u32 %v28, 4294901760
  %1066 = vmatpush1.msra.mxu0 %v1065
  %1067 = vmatprep.subr.mxu0 0.0
  %v1068 = vand.u32 %v27, 4294901760
  %1069 = vmatpush1.msra.mxu0 %v1068
  %1070 = vmatprep.subr.mxu0 0.0
  %v1071 = vand.u32 %v26, 4294901760
  %1072 = vmatpush1.msra.mxu0 %v1071
  %1073 = vmatprep.subr.mxu0 0.0
  %v1074 = vand.u32 %v25, 4294901760
  %1075 = vmatpush1.msra.mxu0 %v1074
  %1076 = vmatprep.subr.mxu0 0.0
  %v1077 = vand.u32 %v24, 4294901760
  %1078 = vmatpush1.msra.mxu0 %v1077
  %1079 = vmatprep.subr.mxu0 0.0
  %1080 = vmatpush2.msra.mxu0 0.0
  %1081 = vmatprep.subr.mxu0 0.0
  %1082 = vmatpush2.msra.mxu0 0.0
  %1083 = vmatprep.subr.mxu0 0.0
  %1084 = vmatpush2.msra.mxu0 0.0
  %1085 = vmatprep.subr.mxu0 0.0
  %1086 = vmatpush2.msra.mxu0 0.0
  %1087 = vmatprep.subr.mxu0 0.0
  %1088 = vmatpush2.msra.mxu0 0.0
  %1089 = vmatprep.subr.mxu0 0.0
  %1090 = vmatpush2.msra.mxu0 0.0
  %1091 = vmatprep.subr.mxu0 0.0
  %1092 = vmatpush2.msra.mxu0 0.0
  %1093 = vmatprep.subr.mxu0 0.0
  %1094 = vmatpush2.msra.mxu0 0.0
  %1095 = vmatprep.subr.mxu0 0.0
  %1096 = vmatpush2.msra.mxu0 0.0
  %1097 = vmatprep.subr.mxu0 0.0
  %1098 = vmatpush2.msra.mxu0 0.0
  %1099 = vmatprep.subr.mxu0 0.0
  %1100 = vmatpush2.msra.mxu0 0.0
  %1101 = vmatprep.subr.mxu0 0.0
  %1102 = vmatpush2.msra.mxu0 0.0
  %1103 = vmatprep.subr.mxu0 0.0
  %1104 = vmatpush2.msra.mxu0 0.0
  %1105 = vmatprep.subr.mxu0 0.0
  %1106 = vmatpush2.msra.mxu0 0.0
  %1107 = vmatprep.subr.mxu0 0.0
  %1108 = vmatpush2.msra.mxu0 0.0
  %1109 = vmatprep.subr.mxu0 0.0
  %1110 = vmatpush2.msra.mxu0 0.0
  %1111 = vmatprep.mubr.f32.mxu0 0.0
  %v1112 = vand.u32 %v684, 4294901760
  %v1113 = vsub.f32 %v684, %v1112
  %v1114 = vand.u32 %v1113, 4294901760
  %1115 = vmatmul.mubr.f32.gmra.mxu0 %v1114
  %v1116 = vpop.f32.mrf.mxu0
  %v1117 = vadd.f32 %v1028, %v1116
  %v1118 = vpop.f32.mrf.mxu0
  %1119 = vdwg.mxu0
  %1120 = vmatprep.subr.mxu0 0.0
  %v1121 = vand.u32 %v39, 4294901760
  %v1122 = vsub.f32 %v39, %v1121
  %v1123 = vand.u32 %v1122, 4294901760
  %1124 = vmatpush1.msra.mxu0 %v1123
  %1125 = vmatprep.subr.mxu0 0.0
  %v1126 = vand.u32 %v38, 4294901760
  %v1127 = vsub.f32 %v38, %v1126
  %v1128 = vand.u32 %v1127, 4294901760
  %1129 = vmatpush1.msra.mxu0 %v1128
  %1130 = vmatprep.subr.mxu0 0.0
  %v1131 = vand.u32 %v37, 4294901760
  %v1132 = vsub.f32 %v37, %v1131
  %v1133 = vand.u32 %v1132, 4294901760
  %1134 = vmatpush1.msra.mxu0 %v1133
  %1135 = vmatprep.subr.mxu0 0.0
  %v1136 = vand.u32 %v36, 4294901760
  %v1137 = vsub.f32 %v36, %v1136
  %v1138 = vand.u32 %v1137, 4294901760
  %1139 = vmatpush1.msra.mxu0 %v1138
  %1140 = vmatprep.subr.mxu0 0.0
  %v1141 = vand.u32 %v35, 4294901760
  %v1142 = vsub.f32 %v35, %v1141
  %v1143 = vand.u32 %v1142, 4294901760
  %1144 = vmatpush1.msra.mxu0 %v1143
  %1145 = vmatprep.subr.mxu0 0.0
  %v1146 = vand.u32 %v34, 4294901760
  %v1147 = vsub.f32 %v34, %v1146
  %v1148 = vand.u32 %v1147, 4294901760
  %1149 = vmatpush1.msra.mxu0 %v1148
  %1150 = vmatprep.subr.mxu0 0.0
  %v1151 = vand.u32 %v33, 4294901760
  %v1152 = vsub.f32 %v33, %v1151
  %v1153 = vand.u32 %v1152, 4294901760
  %1154 = vmatpush1.msra.mxu0 %v1153
  %1155 = vmatprep.subr.mxu0 0.0
  %v1156 = vand.u32 %v32, 4294901760
  %v1157 = vsub.f32 %v32, %v1156
  %v1158 = vand.u32 %v1157, 4294901760
  %1159 = vmatpush1.msra.mxu0 %v1158
  %1160 = vmatprep.subr.mxu0 0.0
  %v1161 = vand.u32 %v31, 4294901760
  %v1162 = vsub.f32 %v31, %v1161
  %v1163 = vand.u32 %v1162, 4294901760
  %1164 = vmatpush1.msra.mxu0 %v1163
  %1165 = vmatprep.subr.mxu0 0.0
  %v1166 = vand.u32 %v30, 4294901760
  %v1167 = vsub.f32 %v30, %v1166
  %v1168 = vand.u32 %v1167, 4294901760
  %1169 = vmatpush1.msra.mxu0 %v1168
  %1170 = vmatprep.subr.mxu0 0.0
  %v1171 = vand.u32 %v29, 4294901760
  %v1172 = vsub.f32 %v29, %v1171
  %v1173 = vand.u32 %v1172, 4294901760
  %1174 = vmatpush1.msra.mxu0 %v1173
  %1175 = vmatprep.subr.mxu0 0.0
  %v1176 = vand.u32 %v28, 4294901760
  %v1177 = vsub.f32 %v28, %v1176
  %v1178 = vand.u32 %v1177, 4294901760
  %1179 = vmatpush1.msra.mxu0 %v1178
  %1180 = vmatprep.subr.mxu0 0.0
  %v1181 = vand.u32 %v27, 4294901760
  %v1182 = vsub.f32 %v27, %v1181
  %v1183 = vand.u32 %v1182, 4294901760
  %1184 = vmatpush1.msra.mxu0 %v1183
  %1185 = vmatprep.subr.mxu0 0.0
  %v1186 = vand.u32 %v26, 4294901760
  %v1187 = vsub.f32 %v26, %v1186
  %v1188 = vand.u32 %v1187, 4294901760
  %1189 = vmatpush1.msra.mxu0 %v1188
  %1190 = vmatprep.subr.mxu0 0.0
  %v1191 = vand.u32 %v25, 4294901760
  %v1192 = vsub.f32 %v25, %v1191
  %v1193 = vand.u32 %v1192, 4294901760
  %1194 = vmatpush1.msra.mxu0 %v1193
  %1195 = vmatprep.subr.mxu0 0.0
  %v1196 = vand.u32 %v24, 4294901760
  %v1197 = vsub.f32 %v24, %v1196
  %v1198 = vand.u32 %v1197, 4294901760
  %1199 = vmatpush1.msra.mxu0 %v1198
  %1200 = vmatprep.subr.mxu0 0.0
  %1201 = vmatpush2.msra.mxu0 0.0
  %1202 = vmatprep.subr.mxu0 0.0
  %1203 = vmatpush2.msra.mxu0 0.0
  %1204 = vmatprep.subr.mxu0 0.0
  %1205 = vmatpush2.msra.mxu0 0.0
  %1206 = vmatprep.subr.mxu0 0.0
  %1207 = vmatpush2.msra.mxu0 0.0
  %1208 = vmatprep.subr.mxu0 0.0
  %1209 = vmatpush2.msra.mxu0 0.0
  %1210 = vmatprep.subr.mxu0 0.0
  %1211 = vmatpush2.msra.mxu0 0.0
  %1212 = vmatprep.subr.mxu0 0.0
  %1213 = vmatpush2.msra.mxu0 0.0
  %1214 = vmatprep.subr.mxu0 0.0
  %1215 = vmatpush2.msra.mxu0 0.0
  %1216 = vmatprep.subr.mxu0 0.0
  %1217 = vmatpush2.msra.mxu0 0.0
  %1218 = vmatprep.subr.mxu0 0.0
  %1219 = vmatpush2.msra.mxu0 0.0
  %1220 = vmatprep.subr.mxu0 0.0
  %1221 = vmatpush2.msra.mxu0 0.0
  %1222 = vmatprep.subr.mxu0 0.0
  %1223 = vmatpush2.msra.mxu0 0.0
  %1224 = vmatprep.subr.mxu0 0.0
  %1225 = vmatpush2.msra.mxu0 0.0
  %1226 = vmatprep.subr.mxu0 0.0
  %1227 = vmatpush2.msra.mxu0 0.0
  %1228 = vmatprep.subr.mxu0 0.0
  %1229 = vmatpush2.msra.mxu0 0.0
  %1230 = vmatprep.subr.mxu0 0.0
  %1231 = vmatpush2.msra.mxu0 0.0
  %1232 = vmatprep.mubr.f32.mxu0 0.0
  %v1233 = vand.u32 %v684, 4294901760
  %1234 = vmatmul.mubr.f32.gmra.mxu0 %v1233
  %v1235 = vpop.f32.mrf.mxu0
  %v1236 = vadd.f32 %v1117, %v1235
  %v1237 = vpop.f32.mrf.mxu0
  %1238 = vdwg.mxu0
  %1239 = vmatprep.subr.mxu0 0.0
  %v1240 = vand.u32 %v39, 4294901760
  %1241 = vmatpush1.msra.mxu0 %v1240
  %1242 = vmatprep.subr.mxu0 0.0
  %v1243 = vand.u32 %v38, 4294901760
  %1244 = vmatpush1.msra.mxu0 %v1243
  %1245 = vmatprep.subr.mxu0 0.0
  %v1246 = vand.u32 %v37, 4294901760
  %1247 = vmatpush1.msra.mxu0 %v1246
  %1248 = vmatprep.subr.mxu0 0.0
  %v1249 = vand.u32 %v36, 4294901760
  %1250 = vmatpush1.msra.mxu0 %v1249
  %1251 = vmatprep.subr.mxu0 0.0
  %v1252 = vand.u32 %v35, 4294901760
  %1253 = vmatpush1.msra.mxu0 %v1252
  %1254 = vmatprep.subr.mxu0 0.0
  %v1255 = vand.u32 %v34, 4294901760
  %1256 = vmatpush1.msra.mxu0 %v1255
  %1257 = vmatprep.subr.mxu0 0.0
  %v1258 = vand.u32 %v33, 4294901760
  %1259 = vmatpush1.msra.mxu0 %v1258
  %1260 = vmatprep.subr.mxu0 0.0
  %v1261 = vand.u32 %v32, 4294901760
  %1262 = vmatpush1.msra.mxu0 %v1261
  %1263 = vmatprep.subr.mxu0 0.0
  %v1264 = vand.u32 %v31, 4294901760
  %1265 = vmatpush1.msra.mxu0 %v1264
  %1266 = vmatprep.subr.mxu0 0.0
  %v1267 = vand.u32 %v30, 4294901760
  %1268 = vmatpush1.msra.mxu0 %v1267
  %1269 = vmatprep.subr.mxu0 0.0
  %v1270 = vand.u32 %v29, 4294901760
  %1271 = vmatpush1.msra.mxu0 %v1270
  %1272 = vmatprep.subr.mxu0 0.0
  %v1273 = vand.u32 %v28, 4294901760
  %1274 = vmatpush1.msra.mxu0 %v1273
  %1275 = vmatprep.subr.mxu0 0.0
  %v1276 = vand.u32 %v27, 4294901760
  %1277 = vmatpush1.msra.mxu0 %v1276
  %1278 = vmatprep.subr.mxu0 0.0
  %v1279 = vand.u32 %v26, 4294901760
  %1280 = vmatpush1.msra.mxu0 %v1279
  %1281 = vmatprep.subr.mxu0 0.0
  %v1282 = vand.u32 %v25, 4294901760
  %1283 = vmatpush1.msra.mxu0 %v1282
  %1284 = vmatprep.subr.mxu0 0.0
  %v1285 = vand.u32 %v24, 4294901760
  %1286 = vmatpush1.msra.mxu0 %v1285
  %1287 = vmatprep.subr.mxu0 0.0
  %1288 = vmatpush2.msra.mxu0 0.0
  %1289 = vmatprep.subr.mxu0 0.0
  %1290 = vmatpush2.msra.mxu0 0.0
  %1291 = vmatprep.subr.mxu0 0.0
  %1292 = vmatpush2.msra.mxu0 0.0
  %1293 = vmatprep.subr.mxu0 0.0
  %1294 = vmatpush2.msra.mxu0 0.0
  %1295 = vmatprep.subr.mxu0 0.0
  %1296 = vmatpush2.msra.mxu0 0.0
  %1297 = vmatprep.subr.mxu0 0.0
  %1298 = vmatpush2.msra.mxu0 0.0
  %1299 = vmatprep.subr.mxu0 0.0
  %1300 = vmatpush2.msra.mxu0 0.0
  %1301 = vmatprep.subr.mxu0 0.0
  %1302 = vmatpush2.msra.mxu0 0.0
  %1303 = vmatprep.subr.mxu0 0.0
  %1304 = vmatpush2.msra.mxu0 0.0
  %1305 = vmatprep.subr.mxu0 0.0
  %1306 = vmatpush2.msra.mxu0 0.0
  %1307 = vmatprep.subr.mxu0 0.0
  %1308 = vmatpush2.msra.mxu0 0.0
  %1309 = vmatprep.subr.mxu0 0.0
  %1310 = vmatpush2.msra.mxu0 0.0
  %1311 = vmatprep.subr.mxu0 0.0
  %1312 = vmatpush2.msra.mxu0 0.0
  %1313 = vmatprep.subr.mxu0 0.0
  %1314 = vmatpush2.msra.mxu0 0.0
  %1315 = vmatprep.subr.mxu0 0.0
  %1316 = vmatpush2.msra.mxu0 0.0
  %1317 = vmatprep.subr.mxu0 0.0
  %1318 = vmatpush2.msra.mxu0 0.0
  %1319 = vmatprep.mubr.f32.mxu0 0.0
  %v1320 = vand.u32 %v684, 4294901760
  %1321 = vmatmul.mubr.f32.gmra.mxu0 %v1320
  %v1322 = vpop.f32.mrf.mxu0
  %v1323 = vadd.f32 %v1236, %v1322
  %v1324 = vpop.f32.mrf.mxu0
  %1325 = vdwg.mxu0
  %v1326 = vmul.f32 %v1323, 0.03125
  %v1327 = vmul.f32 %v683, %v683
  %v1328 = vsub.f32 %v1326, %v1327
  %v1329 = vmax.f32 %v1328, 0.0
  %v1330 = vadd.f32 %v1329, 1e-05
  %v1331 = vrsqrt.pop %v1330
  %v1332 = vsub.f32 %v23, %v683
  %v1333 = vmul.f32 %v1332, %v1331
  %v1335 = vlaneseq
  %v1336 = vshrl.u32 %v1335, 7
  %v1337 = vsub.s32 0, %v1336
  %v1338 = vrot.slane %v40, %v1337
  %v1340 = vmul.f32 %v1333, %v1338
  %v1342 = vlaneseq
  %v1343 = vshrl.u32 %v1342, 7
  %v1344 = vsub.s32 0, %v1343
  %v1345 = vrot.slane %v41, %v1344
  %v1347 = vadd.f32 %v1340, %v1345
  %v1348 = vld [vmem:[%s1] sm:$0xf]
  %v1349 = vld [vmem:[%s3] sm:$0xf]
  %vm1350 = vcmask 31744
  %v1352 = vsel %vm1350, %v1348, 0
  %vm1354 = vcmask 1043456
  %v1356 = vsel %vm1354, %v1349, 0
  %1358 = vmatprep.subr.mxu0 0.0
  %1359 = vmatpush1.msra.mxu0 0.0
  %1360 = vmatprep.subr.mxu0 0.0
  %1361 = vmatpush1.msra.mxu0 0.0
  %1362 = vmatprep.subr.mxu0 0.0
  %1363 = vmatpush1.msra.mxu0 0.0
  %1364 = vmatprep.subr.mxu0 0.0
  %1365 = vmatpush1.msra.mxu0 0.0
  %1366 = vmatprep.subr.mxu0 0.0
  %1367 = vmatpush1.msra.mxu0 0.0
  %1368 = vmatprep.subr.mxu0 0.0
  %1369 = vmatpush1.msra.mxu0 0.0
  %1370 = vmatprep.subr.mxu0 0.0
  %1371 = vmatpush1.msra.mxu0 0.0
  %1372 = vmatprep.subr.mxu0 0.0
  %1373 = vmatpush1.msra.mxu0 0.0
  %1374 = vmatprep.subr.mxu0 0.0
  %1375 = vmatpush1.msra.mxu0 0.0
  %1376 = vmatprep.subr.mxu0 0.0
  %1377 = vmatpush1.msra.mxu0 0.0
  %1378 = vmatprep.subr.mxu0 0.0
  %1379 = vmatpush1.msra.mxu0 0.0
  %1380 = vmatprep.subr.mxu0 0.0
  %1381 = vmatpush1.msra.mxu0 0.0
  %1382 = vmatprep.subr.mxu0 0.0
  %1383 = vmatpush1.msra.mxu0 0.0
  %1384 = vmatprep.subr.mxu0 0.0
  %1385 = vmatpush1.msra.mxu0 0.0
  %1386 = vmatprep.subr.mxu0 0.0
  %1387 = vmatpush1.msra.mxu0 0.0
  %1388 = vmatprep.subr.mxu0 0.0
  %1389 = vmatpush1.msra.mxu0 %v1356
  %1390 = vmatprep.subr.mxu0 0.0
  %1391 = vmatpush2.msra.mxu0 0.0
  %1392 = vmatprep.subr.mxu0 0.0
  %1393 = vmatpush2.msra.mxu0 0.0
  %1394 = vmatprep.subr.mxu0 0.0
  %1395 = vmatpush2.msra.mxu0 0.0
  %1396 = vmatprep.subr.mxu0 0.0
  %1397 = vmatpush2.msra.mxu0 0.0
  %1398 = vmatprep.subr.mxu0 0.0
  %1399 = vmatpush2.msra.mxu0 0.0
  %1400 = vmatprep.subr.mxu0 0.0
  %1401 = vmatpush2.msra.mxu0 0.0
  %1402 = vmatprep.subr.mxu0 0.0
  %1403 = vmatpush2.msra.mxu0 0.0
  %1404 = vmatprep.subr.mxu0 0.0
  %1405 = vmatpush2.msra.mxu0 0.0
  %1406 = vmatprep.subr.mxu0 0.0
  %1407 = vmatpush2.msra.mxu0 0.0
  %1408 = vmatprep.subr.mxu0 0.0
  %1409 = vmatpush2.msra.mxu0 0.0
  %1410 = vmatprep.subr.mxu0 0.0
  %1411 = vmatpush2.msra.mxu0 0.0
  %1412 = vmatprep.subr.mxu0 0.0
  %1413 = vmatpush2.msra.mxu0 0.0
  %1414 = vmatprep.subr.mxu0 0.0
  %1415 = vmatpush2.msra.mxu0 0.0
  %1416 = vmatprep.subr.mxu0 0.0
  %1417 = vmatpush2.msra.mxu0 0.0
  %1418 = vmatprep.subr.mxu0 0.0
  %1419 = vmatpush2.msra.mxu0 0.0
  %1420 = vmatprep.subr.mxu0 0.0
  %1421 = vmatpush2.msra.mxu0 0.0
  %1422 = vmatprep.mubr.f32.mxu0 0.0
  %1423 = vmatmul.mubr.f32.gmra.mxu0 %v1352
  %v1424 = vpop.f32.mrf.mxu0
  %v1425 = vadd.f32 0.0, %v1424
  %v1426 = vpop.f32.mrf.mxu0
  %1427 = vdwg.mxu0
  %v1428 = vmul.f32 %v1347, %v1425
  %1429 = vst [vmem:[%s6] sm:$0xf] %v1428
  // Predicated region
  $region26: #{masked_layer_norm.1} parent=0 // pred_check
    _
  $region27: #{masked_layer_norm.1} parent=0 // pred_check_branch
    %1431 = sbr.rel (0) target = $region29
  $region28: #{masked_layer_norm.1} parent=0 // pred_region
    _
  $region29: #{masked_layer_norm.1} parent=0 // pred_fallthru
    _
  // Predicated region
  $region30: #{masked_layer_norm.1} parent=0 // pred_check
    _
  $region31: #{masked_layer_norm.1} parent=0 // pred_check_branch
    %1433 = sbr.rel (0) target = $region33
  $region32: #{masked_layer_norm.1} parent=0 // pred_region
    _
  $region33: #{masked_layer_norm.1} parent=0 // pred_fallthru
    _

</llo_original>
